<compile_context>
chip_gen: v6e
topology: v6e:2x2x1
jax: 0.10.0
libtpu: 0.0.40
codegen_flags: <defaults>
</compile_context>

<pallas_src>
import math
import functools

import numpy as np
import jax
import jax.numpy as jnp
from jax import lax
from jax.experimental import pallas as pl
from jax.experimental.pallas import tpu as pltpu


def get_uniform_keys(n_keys, dim, seed):
    """Same key initialization as the PyTorch reference."""
    rng = np.random.RandomState(seed)
    bound = 1.0 / math.sqrt(dim)
    return rng.uniform(-bound, bound, (n_keys, dim)).astype(np.float32)


# ----------------------------------------------------------------------------
# Pallas kernel: fused HashingSymbol forward for one batch row-block per step.
# All folded weights have constant block indices -> resident in VMEM across
# the batch grid axis; everything else is computed in-register.
# ----------------------------------------------------------------------------
def _decomposition_kernel(x_ref, m_ref, v_ref, mr_ref, out_ref,
                          *, n_keys, top_k, num_slots):
    x = x_ref[...]                                           # (rb, pad_in)

    # Scores for every slot in ONE matmul; score bias is folded into m_ref via
    # the ones column of x.  (rb, num_slots * n_keys)
    scores = jnp.dot(x, m_ref[...], preferred_element_type=jnp.float32)
    # Residual (shared by all slots); residual bias folded the same way.
    res = jnp.dot(x, mr_ref[...], preferred_element_type=jnp.float32)   # (rb, v_dim)

    neg = jnp.float32(-1e30)
    blocks = []
    for s in range(num_slots):                               # static, unrolled
        sc = scores[:, s * n_keys:(s + 1) * n_keys]          # lane-aligned slice
        work = sc
        row_max = None
        # top-k: one cross-lane max per iteration (XLU); no boolean accumulator.
        for t in range(top_k):
            m = jnp.max(work, axis=-1, keepdims=True)
            if t == 0:
                row_max = m                                  # reused for softmax
            work = jnp.where(work == m, neg, work)
        sel = work == neg                                    # the picked lanes
        # softmax over the selected scores, kept dense over the n_keys lanes.
        e = jnp.where(sel, jnp.exp(sc - row_max), jnp.float32(0.0))
        denom = jnp.sum(e, axis=-1, keepdims=True)           # >= 1, never zero
        w = e * pl.reciprocal(denom, approx=False)
        # EmbeddingBag('sum'): dense weights @ dense per-slot values (+ residual)
        blocks.append(jnp.dot(w, v_ref[s], preferred_element_type=jnp.float32)
                      + res)

    out = blocks[0] if num_slots == 1 else jnp.concatenate(blocks, axis=-1)
    out_ref[...] = out                                       # single lane-dense store


def hashing_symbol_forward(x, M, V, Mr, *, n_keys, top_k, row_block):
    """x: (bs_pad, pad_in) with a folded ones column; returns (bs_pad, S*v_dim)."""
    bs, pad_in = x.shape
    _, K = M.shape                                           # K = S * n_keys
    S = K // n_keys
    v_dim = V.shape[-1]
    o_dim = S * v_dim
    assert bs % row_block == 0 and row_block % 8 == 0

    kernel = functools.partial(_decomposition_kernel, n_keys=n_keys,
                               top_k=top_k, num_slots=S)

    return pl.pallas_call(
        kernel,
        out_shape=jax.ShapeDtypeStruct((bs, o_dim), jnp.float32),
        grid=(bs // row_block,),
        in_specs=[
            pl.BlockSpec((row_block, pad_in), lambda i: (i, 0)),   # x (streams)
            pl.BlockSpec((pad_in, K), lambda i: (0, 0)),           # folded scores+bias
            pl.BlockSpec((S, n_keys, v_dim), lambda i: (0, 0, 0)), # dense values
            pl.BlockSpec((pad_in, v_dim), lambda i: (0, 0)),       # folded residual+bias
        ],
        out_specs=pl.BlockSpec((row_block, o_dim), lambda i: (i, 0)),
        compiler_params=pltpu.CompilerParams(
            dimension_semantics=("parallel",)),                    # v7x: 2 TCs share rows
    )(x, M, V, Mr)


# ----------------------------------------------------------------------------
# Constant folding of the fixed parameters (done once, in plain JAX, at init).
#   scores_s = q @ normalize(keys_s)^T,  q = x @ Wq^T + bq
#            = [x | 1] @ M_aug_s                 (bias folded into last row)
#   residual = [x | 1] @ Mr_aug                  (bq@Wr^T + br folded likewise)
# ----------------------------------------------------------------------------
def _fold_params(wq, bq, wr, br, keys, values, pad_in):
    S, n_keys, k_dim = keys.shape
    v_dim = values.shape[-1]
    in_dim = wq.shape[1]

    keysn = keys / jnp.linalg.norm(keys, axis=-1, keepdims=True)
    M = jnp.einsum('kd,snk->sdn', wq, keysn)                 # (S, in_dim, n_keys)
    b = jnp.einsum('k,snk->sn', bq[0], keysn)                # (S, n_keys)

    M_aug = jnp.zeros((S, pad_in, n_keys), jnp.float32)
    M_aug = M_aug.at[:, :in_dim, :].set(M).at[:, in_dim, :].set(b)
    # column s*n_keys + n  <->  slot s, key n
    M_flat = jnp.transpose(M_aug, (1, 0, 2)).reshape(pad_in, S * n_keys)

    Mr = wq.T @ wr.T                                         # (in_dim, v_dim)
    brf = (bq @ wr.T + br)[0]                                # (v_dim,)
    Mr_aug = jnp.zeros((pad_in, v_dim), jnp.float32)
    Mr_aug = Mr_aug.at[:in_dim].set(Mr).at[in_dim].set(brf)

    return M_flat, values.astype(jnp.float32), Mr_aug


# ----------------------------------------------------------------------------
# Module-equivalent wrapper with deterministic parameter init.
# ----------------------------------------------------------------------------
class DecompositionPallas:
    def __init__(self, input_size, slot_size, binding_num_slots,
                 reasoning_num_slots, n_keys=128, top_k=8, epsilon=1e-6,
                 row_block=None):
        """row_block: rows per grid step (multiple of 8).  None -> whole padded
        batch in one step (best for tiny bs on v5e/v6e).  Set e.g. 512 for large
        batches, or half the padded batch on v7x to feed both TensorCores."""
        self.input_size = input_size
        self.slot_size = slot_size
        self.binding_num_slots = binding_num_slots
        self.reasoning_num_slots = reasoning_num_slots
        self.num_slots = binding_num_slots + reasoning_num_slots
        self.n_keys = n_keys
        self.top_k = top_k
        self.epsilon = epsilon                # unused, kept for API parity
        self.k_dim = slot_size // 2
        self.v_dim = slot_size
        self.row_block = row_block
        # input_dim + 1 (ones column for folded biases), rounded up to 8
        self.pad_in = ((input_size + 1 + 7) // 8) * 8

        # keys: identical to the torch init (numpy RandomState per slot seed)
        all_keys = np.stack([get_uniform_keys(n_keys, self.k_dim, seed=i)
                             for i in range(self.num_slots)], axis=0)
        self.binding_keys = jnp.asarray(all_keys[:binding_num_slots])
        self.reasoning_keys = jnp.asarray(all_keys[binding_num_slots:])

        key = jax.random.PRNGKey(0)
        k1, k2, k3, k4, k5, k6 = jax.random.split(key, 6)
        std = self.v_dim ** (-0.5)
        self.binding_values = std * jax.random.normal(
            k1, (binding_num_slots, n_keys, self.v_dim), jnp.float32)
        self.reasoning_values = std * jax.random.normal(
            k2, (reasoning_num_slots, n_keys, self.v_dim), jnp.float32)

        bq_bound = 1.0 / math.sqrt(input_size)
        self.wq = jax.random.uniform(k3, (self.k_dim, input_size), jnp.float32,
                                     -bq_bound, bq_bound)
        self.bq = jax.random.uniform(k4, (1, self.k_dim), jnp.float32,
                                     -bq_bound, bq_bound)
        br_bound = 1.0 / math.sqrt(self.k_dim)
        self.wr = jax.random.uniform(k5, (self.v_dim, self.k_dim), jnp.float32,
                                     -br_bound, br_bound)
        self.br = jax.random.uniform(k6, (1, self.v_dim), jnp.float32,
                                     -br_bound, br_bound)

        # fold constants once (per-flag sets + a fused all-slot set)
        self._binding_folded = _fold_params(
            self.wq, self.bq, self.wr, self.br,
            self.binding_keys, self.binding_values, self.pad_in)
        self._reasoning_folded = _fold_params(
            self.wq, self.bq, self.wr, self.br,
            self.reasoning_keys, self.reasoning_values, self.pad_in)
        all_k = jnp.concatenate([self.binding_keys, self.reasoning_keys], axis=0)
        all_v = jnp.concatenate([self.binding_values, self.reasoning_values], axis=0)
        self._all_folded = _fold_params(
            self.wq, self.bq, self.wr, self.br, all_k, all_v, self.pad_in)

    # Decomposition.forward is an identity pass-through.
    def forward(self, inputs):
        return inputs

    def _run(self, sentence_sum, folded):
        batch, seq_len, _ = sentence_sum.shape
        x = sentence_sum.reshape(-1, self.input_size)        # (bs, input_dim)
        bs = x.shape[0]
        # append the ones column (folded biases), zero-pad columns to pad_in and
        # rows to a multiple of the row block (>= 8).
        x = jnp.concatenate([x, jnp.ones((bs, 1), jnp.float32)], axis=-1)
        col_pad = self.pad_in - x.shape[-1]
        rb = self.row_block if self.row_block is not None else ((bs + 7) // 8) * 8
        bs_pad = ((bs + rb - 1) // rb) * rb
        x = jnp.pad(x, ((0, bs_pad - bs), (0, col_pad)))

        M, V, Mr = folded
        out = hashing_symbol_forward(x, M, V, Mr, n_keys=self.n_keys,
                                     top_k=self.top_k, row_block=rb)
        # (bs_pad, S*v_dim) -> (batch, seq_len, S, slot_size); no transpose needed.
        return out[:bs].reshape(batch, seq_len, -1, self.slot_size)

    def binding_slot_attention(self, sentence, sentence_sum, mask):
        return self._run(sentence_sum, self._binding_folded)

    def reasoning_slot_attention(self, sentence, sentence_sum, mask):
        return self._run(sentence_sum, self._reasoning_folded)

    def decomposition_slot_attention(self, sentence, sentence_sum, mask):
        """Fused path: binding + reasoning slots in ONE pallas_call."""
        out = self._run(sentence_sum, self._all_folded)
        return (out[..., :self.binding_num_slots, :],
                out[..., self.binding_num_slots:, :])


# ----------------------------------------------------------------------------
# Pure-JAX reference (mirrors the torch semantics) for validation.
# ----------------------------------------------------------------------------
def reference_hashing(x, wq, bq, keys, vals, wr, br, top_k):
    q = x @ wq.T + bq                                        # (bs, k_dim)
    keysn = keys / jnp.linalg.norm(keys, axis=-1, keepdims=True)
    outs = []
    for s in range(keys.shape[0]):
        scores = q @ keysn[s].T                              # (bs, n_keys)
        sc, idx = lax.top_k(scores, top_k)                   # (bs, top_k)
        w = jax.nn.softmax(sc, axis=-1)
        gathered = vals[s][idx]                              # (bs, top_k, v_dim)
        outs.append(jnp.sum(w[..., None] * gathered, axis=1))
    out = jnp.stack(outs, axis=0)                            # (S, bs, v_dim)
    res = q @ wr.T + br                                      # (bs, v_dim)
    return out + res[None]


def _ref_both(model, sentence_sum, batch, seq_len):
    x = sentence_sum.reshape(-1, model.input_size)
    ref_b = reference_hashing(x, model.wq, model.bq, model.binding_keys,
                              model.binding_values, model.wr, model.br,
                              model.top_k)
    ref_b = jnp.transpose(ref_b, (1, 0, 2)).reshape(
        batch, seq_len, model.binding_num_slots, model.slot_size)
    ref_r = reference_hashing(x, model.wq, model.bq, model.reasoning_keys,
                              model.reasoning_values, model.wr, model.br,
                              model.top_k)
    ref_r = jnp.transpose(ref_r, (1, 0, 2)).reshape(
        batch, seq_len, model.reasoning_num_slots, model.slot_size)
    return ref_b, ref_r


if __name__ == "__main__":
    input_size, slot_size = 32, 16
    binding_num_slots, reasoning_num_slots = 4, 4
    n_keys, top_k = 128, 8
    batch, seq_len, word_len = 2, 4, 3

    model = DecompositionPallas(input_size, slot_size, binding_num_slots,
                                reasoning_num_slots, n_keys=n_keys, top_k=top_k)

    key = jax.random.PRNGKey(0)
    sentence = jax.random.normal(key, (batch, seq_len, word_len, input_size),
                                 jnp.float32)
    sentence_sum = jnp.sum(sentence, axis=2)                 # (batch, seq, input_size)
    mask = jnp.ones((batch, seq_len, word_len), jnp.float32)

    # identity forward
    ident = model.forward(sentence)
    assert ident.shape == sentence.shape

    bind_out = jax.block_until_ready(
        model.binding_slot_attention(sentence, sentence_sum, mask))
    reas_out = jax.block_until_ready(
        model.reasoning_slot_attention(sentence, sentence_sum, mask))
    bind_c, reas_c = model.decomposition_slot_attention(sentence, sentence_sum, mask)
    bind_c = jax.block_until_ready(bind_c)
    reas_c = jax.block_until_ready(reas_c)

    assert bind_out.shape == (batch, seq_len, binding_num_slots, slot_size)
    assert reas_out.shape == (batch, seq_len, reasoning_num_slots, slot_size)

    ref_b, ref_r = _ref_both(model, sentence_sum, batch, seq_len)
    np.testing.assert_allclose(np.asarray(bind_out), np.asarray(ref_b),
                               rtol=1e-4, atol=1e-4)
    np.testing.assert_allclose(np.asarray(reas_out), np.asarray(ref_r),
                               rtol=1e-4, atol=1e-4)
    np.testing.assert_allclose(np.asarray(bind_c), np.asarray(ref_b),
                               rtol=1e-4, atol=1e-4)
    np.testing.assert_allclose(np.asarray(reas_c), np.asarray(ref_r),
                               rtol=1e-4, atol=1e-4)

    # Multi-step "parallel" batch grid (v7x: both TensorCores; weights stay
    # resident in VMEM across steps).  Init is deterministic -> same params.
    batch2 = 4
    sentence2 = jax.random.normal(jax.random.PRNGKey(1),
                                  (batch2, seq_len, word_len, input_size),
                                  jnp.float32)
    sentence_sum2 = jnp.sum(sentence2, axis=2)
    mask2 = jnp.ones((batch2, seq_len, word_len), jnp.float32)
    model2 = DecompositionPallas(input_size, slot_size, binding_num_slots,
                                 reasoning_num_slots, n_keys=n_keys, top_k=top_k,
                                 row_block=8)                # bs=16 -> grid=(2,)
    b2, r2 = model2.decomposition_slot_attention(sentence2, sentence_sum2, mask2)
    b2 = jax.block_until_ready(b2)
    r2 = jax.block_until_ready(r2)
    ref_b2, ref_r2 = _ref_both(model2, sentence_sum2, batch2, seq_len)
    np.testing.assert_allclose(np.asarray(b2), np.asarray(ref_b2),
                               rtol=1e-4, atol=1e-4)
    np.testing.assert_allclose(np.asarray(r2), np.asarray(ref_r2),
                               rtol=1e-4, atol=1e-4)

    print("KERNEL_OK")
</pallas_src>

<mosaic_0001>
module attributes {stable_mosaic.version = 11 : i64} {
  func.func @_decomposition_kernel(%arg0: i32, %arg1: memref<8x40xf32, #tpu.memory_space<vmem>>, %arg2: memref<40x512xf32, #tpu.memory_space<vmem>>, %arg3: memref<4x128x16xf32, #tpu.memory_space<vmem>>, %arg4: memref<40x16xf32, #tpu.memory_space<vmem>>, %arg5: memref<8x64xf32, #tpu.memory_space<vmem>>) attributes {dimension_semantics = [#tpu.dimension_semantics<parallel>], iteration_bounds = array<i64: 1>, scalar_prefetch = 0 : i64, scratch_operands = 0 : i64, tpu.core_type = #tpu.core_type<tc>, window_params = [{transform_indices = @transform_0, window_bounds = array<i64: 8, 40>}, {pipeline_mode = #tpu.pipeline_mode<synchronous>, transform_indices = @transform_1, window_bounds = array<i64: 40, 512>}, {pipeline_mode = #tpu.pipeline_mode<synchronous>, transform_indices = @transform_2, window_bounds = array<i64: 4, 128, 16>}, {pipeline_mode = #tpu.pipeline_mode<synchronous>, transform_indices = @transform_3, window_bounds = array<i64: 40, 16>}, {transform_indices = @transform_4, window_bounds = array<i64: 8, 64>}]} {
    %c0 = arith.constant 0 : index
    %c0_0 = arith.constant 0 : index
    %0 = vector.load %arg1[%c0, %c0_0] : memref<8x40xf32, #tpu.memory_space<vmem>>, vector<8x40xf32>
    %c0_1 = arith.constant 0 : index
    %c0_2 = arith.constant 0 : index
    %1 = vector.load %arg2[%c0_1, %c0_2] : memref<40x512xf32, #tpu.memory_space<vmem>>, vector<40x512xf32>
    %cst = arith.constant dense<0.000000e+00> : vector<8x512xf32>
    %2 = tpu.matmul %0, %1, %cst {dimension_numbers = #tpu.dot_dimension_numbers<[1], [0], [0], [1], [0, 0, 1, 1], [], []>} : vector<8x40xf32>, vector<40x512xf32>, vector<8x512xf32> -> vector<8x512xf32>
    %c0_3 = arith.constant 0 : index
    %c0_4 = arith.constant 0 : index
    %3 = vector.load %arg4[%c0_3, %c0_4] : memref<40x16xf32, #tpu.memory_space<vmem>>, vector<40x16xf32>
    %cst_5 = arith.constant dense<0.000000e+00> : vector<8x16xf32>
    %4 = tpu.matmul %0, %3, %cst_5 {dimension_numbers = #tpu.dot_dimension_numbers<[1], [0], [0], [1], [0, 0, 1, 1], [], []>} : vector<8x40xf32>, vector<40x16xf32>, vector<8x16xf32> -> vector<8x16xf32>
    %5 = vector.extract_strided_slice %2 {offsets = [0, 0], sizes = [8, 128], strides = [1, 1]} : vector<8x512xf32> to vector<8x128xf32>
    %cst_6 = arith.constant dense<0xFF800000> : vector<8xf32>
    %6 = vector.multi_reduction <maximumf>, %5, %cst_6 [1] : vector<8x128xf32> to vector<8xf32>
    %7 = vector.shape_cast %6 : vector<8xf32> to vector<8x1xf32>
    %8 = vector.broadcast %7 : vector<8x1xf32> to vector<8x128xf32>
    %9 = arith.cmpf oeq, %5, %8 : vector<8x128xf32>
    %cst_7 = arith.constant -1.000000e+30 : f32
    %10 = vector.broadcast %cst_7 : f32 to vector<8x128xf32>
    %11 = arith.select %9, %10, %5 : vector<8x128xi1>, vector<8x128xf32>
    %cst_8 = arith.constant dense<0xFF800000> : vector<8xf32>
    %12 = vector.multi_reduction <maximumf>, %11, %cst_8 [1] : vector<8x128xf32> to vector<8xf32>
    %13 = vector.shape_cast %12 : vector<8xf32> to vector<8x1xf32>
    %14 = vector.broadcast %13 : vector<8x1xf32> to vector<8x128xf32>
    %15 = arith.cmpf oeq, %11, %14 : vector<8x128xf32>
    %cst_9 = arith.constant -1.000000e+30 : f32
    %16 = vector.broadcast %cst_9 : f32 to vector<8x128xf32>
    %17 = arith.select %15, %16, %11 : vector<8x128xi1>, vector<8x128xf32>
    %cst_10 = arith.constant dense<0xFF800000> : vector<8xf32>
    %18 = vector.multi_reduction <maximumf>, %17, %cst_10 [1] : vector<8x128xf32> to vector<8xf32>
    %19 = vector.shape_cast %18 : vector<8xf32> to vector<8x1xf32>
    %20 = vector.broadcast %19 : vector<8x1xf32> to vector<8x128xf32>
    %21 = arith.cmpf oeq, %17, %20 : vector<8x128xf32>
    %cst_11 = arith.constant -1.000000e+30 : f32
    %22 = vector.broadcast %cst_11 : f32 to vector<8x128xf32>
    %23 = arith.select %21, %22, %17 : vector<8x128xi1>, vector<8x128xf32>
    %cst_12 = arith.constant dense<0xFF800000> : vector<8xf32>
    %24 = vector.multi_reduction <maximumf>, %23, %cst_12 [1] : vector<8x128xf32> to vector<8xf32>
    %25 = vector.shape_cast %24 : vector<8xf32> to vector<8x1xf32>
    %26 = vector.broadcast %25 : vector<8x1xf32> to vector<8x128xf32>
    %27 = arith.cmpf oeq, %23, %26 : vector<8x128xf32>
    %cst_13 = arith.constant -1.000000e+30 : f32
    %28 = vector.broadcast %cst_13 : f32 to vector<8x128xf32>
    %29 = arith.select %27, %28, %23 : vector<8x128xi1>, vector<8x128xf32>
    %cst_14 = arith.constant dense<0xFF800000> : vector<8xf32>
    %30 = vector.multi_reduction <maximumf>, %29, %cst_14 [1] : vector<8x128xf32> to vector<8xf32>
    %31 = vector.shape_cast %30 : vector<8xf32> to vector<8x1xf32>
    %32 = vector.broadcast %31 : vector<8x1xf32> to vector<8x128xf32>
    %33 = arith.cmpf oeq, %29, %32 : vector<8x128xf32>
    %cst_15 = arith.constant -1.000000e+30 : f32
    %34 = vector.broadcast %cst_15 : f32 to vector<8x128xf32>
    %35 = arith.select %33, %34, %29 : vector<8x128xi1>, vector<8x128xf32>
    %cst_16 = arith.constant dense<0xFF800000> : vector<8xf32>
    %36 = vector.multi_reduction <maximumf>, %35, %cst_16 [1] : vector<8x128xf32> to vector<8xf32>
    %37 = vector.shape_cast %36 : vector<8xf32> to vector<8x1xf32>
    %38 = vector.broadcast %37 : vector<8x1xf32> to vector<8x128xf32>
    %39 = arith.cmpf oeq, %35, %38 : vector<8x128xf32>
    %cst_17 = arith.constant -1.000000e+30 : f32
    %40 = vector.broadcast %cst_17 : f32 to vector<8x128xf32>
    %41 = arith.select %39, %40, %35 : vector<8x128xi1>, vector<8x128xf32>
    %cst_18 = arith.constant dense<0xFF800000> : vector<8xf32>
    %42 = vector.multi_reduction <maximumf>, %41, %cst_18 [1] : vector<8x128xf32> to vector<8xf32>
    %43 = vector.shape_cast %42 : vector<8xf32> to vector<8x1xf32>
    %44 = vector.broadcast %43 : vector<8x1xf32> to vector<8x128xf32>
    %45 = arith.cmpf oeq, %41, %44 : vector<8x128xf32>
    %cst_19 = arith.constant -1.000000e+30 : f32
    %46 = vector.broadcast %cst_19 : f32 to vector<8x128xf32>
    %47 = arith.select %45, %46, %41 : vector<8x128xi1>, vector<8x128xf32>
    %cst_20 = arith.constant dense<0xFF800000> : vector<8xf32>
    %48 = vector.multi_reduction <maximumf>, %47, %cst_20 [1] : vector<8x128xf32> to vector<8xf32>
    %49 = vector.shape_cast %48 : vector<8xf32> to vector<8x1xf32>
    %50 = vector.broadcast %49 : vector<8x1xf32> to vector<8x128xf32>
    %51 = arith.cmpf oeq, %47, %50 : vector<8x128xf32>
    %cst_21 = arith.constant -1.000000e+30 : f32
    %52 = vector.broadcast %cst_21 : f32 to vector<8x128xf32>
    %53 = arith.select %51, %52, %47 : vector<8x128xi1>, vector<8x128xf32>
    %cst_22 = arith.constant -1.000000e+30 : f32
    %54 = vector.broadcast %cst_22 : f32 to vector<8x128xf32>
    %55 = arith.cmpf oeq, %53, %54 : vector<8x128xf32>
    %56 = vector.broadcast %7 : vector<8x1xf32> to vector<8x128xf32>
    %57 = arith.subf %5, %56 : vector<8x128xf32>
    %58 = math.exp %57 : vector<8x128xf32>
    %cst_23 = arith.constant 0.000000e+00 : f32
    %59 = vector.broadcast %cst_23 : f32 to vector<8x128xf32>
    %60 = arith.select %55, %58, %59 : vector<8x128xi1>, vector<8x128xf32>
    %cst_24 = arith.constant dense<0.000000e+00> : vector<8xf32>
    %61 = vector.multi_reduction <add>, %60, %cst_24 [1] : vector<8x128xf32> to vector<8xf32>
    %62 = vector.shape_cast %61 : vector<8xf32> to vector<8x1xf32>
    %63 = tpu.reciprocal %62 : vector<8x1xf32> -> vector<8x1xf32>
    %64 = vector.broadcast %63 : vector<8x1xf32> to vector<8x128xf32>
    %65 = arith.mulf %60, %64 : vector<8x128xf32>
    %c0_25 = arith.constant 0 : index
    %c0_26 = arith.constant 0 : index
    %c0_27 = arith.constant 0 : index
    %66 = vector.load %arg3[%c0_25, %c0_26, %c0_27] : memref<4x128x16xf32, #tpu.memory_space<vmem>>, vector<1x128x16xf32>
    %67 = vector.shape_cast %66 : vector<1x128x16xf32> to vector<128x16xf32>
    %cst_28 = arith.constant dense<0.000000e+00> : vector<8x16xf32>
    %68 = tpu.matmul %65, %67, %cst_28 {dimension_numbers = #tpu.dot_dimension_numbers<[1], [0], [0], [1], [0, 0, 1, 1], [], []>} : vector<8x128xf32>, vector<128x16xf32>, vector<8x16xf32> -> vector<8x16xf32>
    %69 = arith.addf %68, %4 : vector<8x16xf32>
    %70 = vector.extract_strided_slice %2 {offsets = [0, 128], sizes = [8, 128], strides = [1, 1]} : vector<8x512xf32> to vector<8x128xf32>
    %cst_29 = arith.constant dense<0xFF800000> : vector<8xf32>
    %71 = vector.multi_reduction <maximumf>, %70, %cst_29 [1] : vector<8x128xf32> to vector<8xf32>
    %72 = vector.shape_cast %71 : vector<8xf32> to vector<8x1xf32>
    %73 = vector.broadcast %72 : vector<8x1xf32> to vector<8x128xf32>
    %74 = arith.cmpf oeq, %70, %73 : vector<8x128xf32>
    %cst_30 = arith.constant -1.000000e+30 : f32
    %75 = vector.broadcast %cst_30 : f32 to vector<8x128xf32>
    %76 = arith.select %74, %75, %70 : vector<8x128xi1>, vector<8x128xf32>
    %cst_31 = arith.constant dense<0xFF800000> : vector<8xf32>
    %77 = vector.multi_reduction <maximumf>, %76, %cst_31 [1] : vector<8x128xf32> to vector<8xf32>
    %78 = vector.shape_cast %77 : vector<8xf32> to vector<8x1xf32>
    %79 = vector.broadcast %78 : vector<8x1xf32> to vector<8x128xf32>
    %80 = arith.cmpf oeq, %76, %79 : vector<8x128xf32>
    %cst_32 = arith.constant -1.000000e+30 : f32
    %81 = vector.broadcast %cst_32 : f32 to vector<8x128xf32>
    %82 = arith.select %80, %81, %76 : vector<8x128xi1>, vector<8x128xf32>
    %cst_33 = arith.constant dense<0xFF800000> : vector<8xf32>
    %83 = vector.multi_reduction <maximumf>, %82, %cst_33 [1] : vector<8x128xf32> to vector<8xf32>
    %84 = vector.shape_cast %83 : vector<8xf32> to vector<8x1xf32>
    %85 = vector.broadcast %84 : vector<8x1xf32> to vector<8x128xf32>
    %86 = arith.cmpf oeq, %82, %85 : vector<8x128xf32>
    %cst_34 = arith.constant -1.000000e+30 : f32
    %87 = vector.broadcast %cst_34 : f32 to vector<8x128xf32>
    %88 = arith.select %86, %87, %82 : vector<8x128xi1>, vector<8x128xf32>
    %cst_35 = arith.constant dense<0xFF800000> : vector<8xf32>
    %89 = vector.multi_reduction <maximumf>, %88, %cst_35 [1] : vector<8x128xf32> to vector<8xf32>
    %90 = vector.shape_cast %89 : vector<8xf32> to vector<8x1xf32>
    %91 = vector.broadcast %90 : vector<8x1xf32> to vector<8x128xf32>
    %92 = arith.cmpf oeq, %88, %91 : vector<8x128xf32>
    %cst_36 = arith.constant -1.000000e+30 : f32
    %93 = vector.broadcast %cst_36 : f32 to vector<8x128xf32>
    %94 = arith.select %92, %93, %88 : vector<8x128xi1>, vector<8x128xf32>
    %cst_37 = arith.constant dense<0xFF800000> : vector<8xf32>
    %95 = vector.multi_reduction <maximumf>, %94, %cst_37 [1] : vector<8x128xf32> to vector<8xf32>
    %96 = vector.shape_cast %95 : vector<8xf32> to vector<8x1xf32>
    %97 = vector.broadcast %96 : vector<8x1xf32> to vector<8x128xf32>
    %98 = arith.cmpf oeq, %94, %97 : vector<8x128xf32>
    %cst_38 = arith.constant -1.000000e+30 : f32
    %99 = vector.broadcast %cst_38 : f32 to vector<8x128xf32>
    %100 = arith.select %98, %99, %94 : vector<8x128xi1>, vector<8x128xf32>
    %cst_39 = arith.constant dense<0xFF800000> : vector<8xf32>
    %101 = vector.multi_reduction <maximumf>, %100, %cst_39 [1] : vector<8x128xf32> to vector<8xf32>
    %102 = vector.shape_cast %101 : vector<8xf32> to vector<8x1xf32>
    %103 = vector.broadcast %102 : vector<8x1xf32> to vector<8x128xf32>
    %104 = arith.cmpf oeq, %100, %103 : vector<8x128xf32>
    %cst_40 = arith.constant -1.000000e+30 : f32
    %105 = vector.broadcast %cst_40 : f32 to vector<8x128xf32>
    %106 = arith.select %104, %105, %100 : vector<8x128xi1>, vector<8x128xf32>
    %cst_41 = arith.constant dense<0xFF800000> : vector<8xf32>
    %107 = vector.multi_reduction <maximumf>, %106, %cst_41 [1] : vector<8x128xf32> to vector<8xf32>
    %108 = vector.shape_cast %107 : vector<8xf32> to vector<8x1xf32>
    %109 = vector.broadcast %108 : vector<8x1xf32> to vector<8x128xf32>
    %110 = arith.cmpf oeq, %106, %109 : vector<8x128xf32>
    %cst_42 = arith.constant -1.000000e+30 : f32
    %111 = vector.broadcast %cst_42 : f32 to vector<8x128xf32>
    %112 = arith.select %110, %111, %106 : vector<8x128xi1>, vector<8x128xf32>
    %cst_43 = arith.constant dense<0xFF800000> : vector<8xf32>
    %113 = vector.multi_reduction <maximumf>, %112, %cst_43 [1] : vector<8x128xf32> to vector<8xf32>
    %114 = vector.shape_cast %113 : vector<8xf32> to vector<8x1xf32>
    %115 = vector.broadcast %114 : vector<8x1xf32> to vector<8x128xf32>
    %116 = arith.cmpf oeq, %112, %115 : vector<8x128xf32>
    %cst_44 = arith.constant -1.000000e+30 : f32
    %117 = vector.broadcast %cst_44 : f32 to vector<8x128xf32>
    %118 = arith.select %116, %117, %112 : vector<8x128xi1>, vector<8x128xf32>
    %cst_45 = arith.constant -1.000000e+30 : f32
    %119 = vector.broadcast %cst_45 : f32 to vector<8x128xf32>
    %120 = arith.cmpf oeq, %118, %119 : vector<8x128xf32>
    %121 = vector.broadcast %72 : vector<8x1xf32> to vector<8x128xf32>
    %122 = arith.subf %70, %121 : vector<8x128xf32>
    %123 = math.exp %122 : vector<8x128xf32>
    %cst_46 = arith.constant 0.000000e+00 : f32
    %124 = vector.broadcast %cst_46 : f32 to vector<8x128xf32>
    %125 = arith.select %120, %123, %124 : vector<8x128xi1>, vector<8x128xf32>
    %cst_47 = arith.constant dense<0.000000e+00> : vector<8xf32>
    %126 = vector.multi_reduction <add>, %125, %cst_47 [1] : vector<8x128xf32> to vector<8xf32>
    %127 = vector.shape_cast %126 : vector<8xf32> to vector<8x1xf32>
    %128 = tpu.reciprocal %127 : vector<8x1xf32> -> vector<8x1xf32>
    %129 = vector.broadcast %128 : vector<8x1xf32> to vector<8x128xf32>
    %130 = arith.mulf %125, %129 : vector<8x128xf32>
    %c1 = arith.constant 1 : index
    %c0_48 = arith.constant 0 : index
    %c0_49 = arith.constant 0 : index
    %131 = vector.load %arg3[%c1, %c0_48, %c0_49] : memref<4x128x16xf32, #tpu.memory_space<vmem>>, vector<1x128x16xf32>
    %132 = vector.shape_cast %131 : vector<1x128x16xf32> to vector<128x16xf32>
    %cst_50 = arith.constant dense<0.000000e+00> : vector<8x16xf32>
    %133 = tpu.matmul %130, %132, %cst_50 {dimension_numbers = #tpu.dot_dimension_numbers<[1], [0], [0], [1], [0, 0, 1, 1], [], []>} : vector<8x128xf32>, vector<128x16xf32>, vector<8x16xf32> -> vector<8x16xf32>
    %134 = arith.addf %133, %4 : vector<8x16xf32>
    %135 = vector.extract_strided_slice %2 {offsets = [0, 256], sizes = [8, 128], strides = [1, 1]} : vector<8x512xf32> to vector<8x128xf32>
    %cst_51 = arith.constant dense<0xFF800000> : vector<8xf32>
    %136 = vector.multi_reduction <maximumf>, %135, %cst_51 [1] : vector<8x128xf32> to vector<8xf32>
    %137 = vector.shape_cast %136 : vector<8xf32> to vector<8x1xf32>
    %138 = vector.broadcast %137 : vector<8x1xf32> to vector<8x128xf32>
    %139 = arith.cmpf oeq, %135, %138 : vector<8x128xf32>
    %cst_52 = arith.constant -1.000000e+30 : f32
    %140 = vector.broadcast %cst_52 : f32 to vector<8x128xf32>
    %141 = arith.select %139, %140, %135 : vector<8x128xi1>, vector<8x128xf32>
    %cst_53 = arith.constant dense<0xFF800000> : vector<8xf32>
    %142 = vector.multi_reduction <maximumf>, %141, %cst_53 [1] : vector<8x128xf32> to vector<8xf32>
    %143 = vector.shape_cast %142 : vector<8xf32> to vector<8x1xf32>
    %144 = vector.broadcast %143 : vector<8x1xf32> to vector<8x128xf32>
    %145 = arith.cmpf oeq, %141, %144 : vector<8x128xf32>
    %cst_54 = arith.constant -1.000000e+30 : f32
    %146 = vector.broadcast %cst_54 : f32 to vector<8x128xf32>
    %147 = arith.select %145, %146, %141 : vector<8x128xi1>, vector<8x128xf32>
    %cst_55 = arith.constant dense<0xFF800000> : vector<8xf32>
    %148 = vector.multi_reduction <maximumf>, %147, %cst_55 [1] : vector<8x128xf32> to vector<8xf32>
    %149 = vector.shape_cast %148 : vector<8xf32> to vector<8x1xf32>
    %150 = vector.broadcast %149 : vector<8x1xf32> to vector<8x128xf32>
    %151 = arith.cmpf oeq, %147, %150 : vector<8x128xf32>
    %cst_56 = arith.constant -1.000000e+30 : f32
    %152 = vector.broadcast %cst_56 : f32 to vector<8x128xf32>
    %153 = arith.select %151, %152, %147 : vector<8x128xi1>, vector<8x128xf32>
    %cst_57 = arith.constant dense<0xFF800000> : vector<8xf32>
    %154 = vector.multi_reduction <maximumf>, %153, %cst_57 [1] : vector<8x128xf32> to vector<8xf32>
    %155 = vector.shape_cast %154 : vector<8xf32> to vector<8x1xf32>
    %156 = vector.broadcast %155 : vector<8x1xf32> to vector<8x128xf32>
    %157 = arith.cmpf oeq, %153, %156 : vector<8x128xf32>
    %cst_58 = arith.constant -1.000000e+30 : f32
    %158 = vector.broadcast %cst_58 : f32 to vector<8x128xf32>
    %159 = arith.select %157, %158, %153 : vector<8x128xi1>, vector<8x128xf32>
    %cst_59 = arith.constant dense<0xFF800000> : vector<8xf32>
    %160 = vector.multi_reduction <maximumf>, %159, %cst_59 [1] : vector<8x128xf32> to vector<8xf32>
    %161 = vector.shape_cast %160 : vector<8xf32> to vector<8x1xf32>
    %162 = vector.broadcast %161 : vector<8x1xf32> to vector<8x128xf32>
    %163 = arith.cmpf oeq, %159, %162 : vector<8x128xf32>
    %cst_60 = arith.constant -1.000000e+30 : f32
    %164 = vector.broadcast %cst_60 : f32 to vector<8x128xf32>
    %165 = arith.select %163, %164, %159 : vector<8x128xi1>, vector<8x128xf32>
    %cst_61 = arith.constant dense<0xFF800000> : vector<8xf32>
    %166 = vector.multi_reduction <maximumf>, %165, %cst_61 [1] : vector<8x128xf32> to vector<8xf32>
    %167 = vector.shape_cast %166 : vector<8xf32> to vector<8x1xf32>
    %168 = vector.broadcast %167 : vector<8x1xf32> to vector<8x128xf32>
    %169 = arith.cmpf oeq, %165, %168 : vector<8x128xf32>
    %cst_62 = arith.constant -1.000000e+30 : f32
    %170 = vector.broadcast %cst_62 : f32 to vector<8x128xf32>
    %171 = arith.select %169, %170, %165 : vector<8x128xi1>, vector<8x128xf32>
    %cst_63 = arith.constant dense<0xFF800000> : vector<8xf32>
    %172 = vector.multi_reduction <maximumf>, %171, %cst_63 [1] : vector<8x128xf32> to vector<8xf32>
    %173 = vector.shape_cast %172 : vector<8xf32> to vector<8x1xf32>
    %174 = vector.broadcast %173 : vector<8x1xf32> to vector<8x128xf32>
    %175 = arith.cmpf oeq, %171, %174 : vector<8x128xf32>
    %cst_64 = arith.constant -1.000000e+30 : f32
    %176 = vector.broadcast %cst_64 : f32 to vector<8x128xf32>
    %177 = arith.select %175, %176, %171 : vector<8x128xi1>, vector<8x128xf32>
    %cst_65 = arith.constant dense<0xFF800000> : vector<8xf32>
    %178 = vector.multi_reduction <maximumf>, %177, %cst_65 [1] : vector<8x128xf32> to vector<8xf32>
    %179 = vector.shape_cast %178 : vector<8xf32> to vector<8x1xf32>
    %180 = vector.broadcast %179 : vector<8x1xf32> to vector<8x128xf32>
    %181 = arith.cmpf oeq, %177, %180 : vector<8x128xf32>
    %cst_66 = arith.constant -1.000000e+30 : f32
    %182 = vector.broadcast %cst_66 : f32 to vector<8x128xf32>
    %183 = arith.select %181, %182, %177 : vector<8x128xi1>, vector<8x128xf32>
    %cst_67 = arith.constant -1.000000e+30 : f32
    %184 = vector.broadcast %cst_67 : f32 to vector<8x128xf32>
    %185 = arith.cmpf oeq, %183, %184 : vector<8x128xf32>
    %186 = vector.broadcast %137 : vector<8x1xf32> to vector<8x128xf32>
    %187 = arith.subf %135, %186 : vector<8x128xf32>
    %188 = math.exp %187 : vector<8x128xf32>
    %cst_68 = arith.constant 0.000000e+00 : f32
    %189 = vector.broadcast %cst_68 : f32 to vector<8x128xf32>
    %190 = arith.select %185, %188, %189 : vector<8x128xi1>, vector<8x128xf32>
    %cst_69 = arith.constant dense<0.000000e+00> : vector<8xf32>
    %191 = vector.multi_reduction <add>, %190, %cst_69 [1] : vector<8x128xf32> to vector<8xf32>
    %192 = vector.shape_cast %191 : vector<8xf32> to vector<8x1xf32>
    %193 = tpu.reciprocal %192 : vector<8x1xf32> -> vector<8x1xf32>
    %194 = vector.broadcast %193 : vector<8x1xf32> to vector<8x128xf32>
    %195 = arith.mulf %190, %194 : vector<8x128xf32>
    %c2 = arith.constant 2 : index
    %c0_70 = arith.constant 0 : index
    %c0_71 = arith.constant 0 : index
    %196 = vector.load %arg3[%c2, %c0_70, %c0_71] : memref<4x128x16xf32, #tpu.memory_space<vmem>>, vector<1x128x16xf32>
    %197 = vector.shape_cast %196 : vector<1x128x16xf32> to vector<128x16xf32>
    %cst_72 = arith.constant dense<0.000000e+00> : vector<8x16xf32>
    %198 = tpu.matmul %195, %197, %cst_72 {dimension_numbers = #tpu.dot_dimension_numbers<[1], [0], [0], [1], [0, 0, 1, 1], [], []>} : vector<8x128xf32>, vector<128x16xf32>, vector<8x16xf32> -> vector<8x16xf32>
    %199 = arith.addf %198, %4 : vector<8x16xf32>
    %200 = vector.extract_strided_slice %2 {offsets = [0, 384], sizes = [8, 128], strides = [1, 1]} : vector<8x512xf32> to vector<8x128xf32>
    %cst_73 = arith.constant dense<0xFF800000> : vector<8xf32>
    %201 = vector.multi_reduction <maximumf>, %200, %cst_73 [1] : vector<8x128xf32> to vector<8xf32>
    %202 = vector.shape_cast %201 : vector<8xf32> to vector<8x1xf32>
    %203 = vector.broadcast %202 : vector<8x1xf32> to vector<8x128xf32>
    %204 = arith.cmpf oeq, %200, %203 : vector<8x128xf32>
    %cst_74 = arith.constant -1.000000e+30 : f32
    %205 = vector.broadcast %cst_74 : f32 to vector<8x128xf32>
    %206 = arith.select %204, %205, %200 : vector<8x128xi1>, vector<8x128xf32>
    %cst_75 = arith.constant dense<0xFF800000> : vector<8xf32>
    %207 = vector.multi_reduction <maximumf>, %206, %cst_75 [1] : vector<8x128xf32> to vector<8xf32>
    %208 = vector.shape_cast %207 : vector<8xf32> to vector<8x1xf32>
    %209 = vector.broadcast %208 : vector<8x1xf32> to vector<8x128xf32>
    %210 = arith.cmpf oeq, %206, %209 : vector<8x128xf32>
    %cst_76 = arith.constant -1.000000e+30 : f32
    %211 = vector.broadcast %cst_76 : f32 to vector<8x128xf32>
    %212 = arith.select %210, %211, %206 : vector<8x128xi1>, vector<8x128xf32>
    %cst_77 = arith.constant dense<0xFF800000> : vector<8xf32>
    %213 = vector.multi_reduction <maximumf>, %212, %cst_77 [1] : vector<8x128xf32> to vector<8xf32>
    %214 = vector.shape_cast %213 : vector<8xf32> to vector<8x1xf32>
    %215 = vector.broadcast %214 : vector<8x1xf32> to vector<8x128xf32>
    %216 = arith.cmpf oeq, %212, %215 : vector<8x128xf32>
    %cst_78 = arith.constant -1.000000e+30 : f32
    %217 = vector.broadcast %cst_78 : f32 to vector<8x128xf32>
    %218 = arith.select %216, %217, %212 : vector<8x128xi1>, vector<8x128xf32>
    %cst_79 = arith.constant dense<0xFF800000> : vector<8xf32>
    %219 = vector.multi_reduction <maximumf>, %218, %cst_79 [1] : vector<8x128xf32> to vector<8xf32>
    %220 = vector.shape_cast %219 : vector<8xf32> to vector<8x1xf32>
    %221 = vector.broadcast %220 : vector<8x1xf32> to vector<8x128xf32>
    %222 = arith.cmpf oeq, %218, %221 : vector<8x128xf32>
    %cst_80 = arith.constant -1.000000e+30 : f32
    %223 = vector.broadcast %cst_80 : f32 to vector<8x128xf32>
    %224 = arith.select %222, %223, %218 : vector<8x128xi1>, vector<8x128xf32>
    %cst_81 = arith.constant dense<0xFF800000> : vector<8xf32>
    %225 = vector.multi_reduction <maximumf>, %224, %cst_81 [1] : vector<8x128xf32> to vector<8xf32>
    %226 = vector.shape_cast %225 : vector<8xf32> to vector<8x1xf32>
    %227 = vector.broadcast %226 : vector<8x1xf32> to vector<8x128xf32>
    %228 = arith.cmpf oeq, %224, %227 : vector<8x128xf32>
    %cst_82 = arith.constant -1.000000e+30 : f32
    %229 = vector.broadcast %cst_82 : f32 to vector<8x128xf32>
    %230 = arith.select %228, %229, %224 : vector<8x128xi1>, vector<8x128xf32>
    %cst_83 = arith.constant dense<0xFF800000> : vector<8xf32>
    %231 = vector.multi_reduction <maximumf>, %230, %cst_83 [1] : vector<8x128xf32> to vector<8xf32>
    %232 = vector.shape_cast %231 : vector<8xf32> to vector<8x1xf32>
    %233 = vector.broadcast %232 : vector<8x1xf32> to vector<8x128xf32>
    %234 = arith.cmpf oeq, %230, %233 : vector<8x128xf32>
    %cst_84 = arith.constant -1.000000e+30 : f32
    %235 = vector.broadcast %cst_84 : f32 to vector<8x128xf32>
    %236 = arith.select %234, %235, %230 : vector<8x128xi1>, vector<8x128xf32>
    %cst_85 = arith.constant dense<0xFF800000> : vector<8xf32>
    %237 = vector.multi_reduction <maximumf>, %236, %cst_85 [1] : vector<8x128xf32> to vector<8xf32>
    %238 = vector.shape_cast %237 : vector<8xf32> to vector<8x1xf32>
    %239 = vector.broadcast %238 : vector<8x1xf32> to vector<8x128xf32>
    %240 = arith.cmpf oeq, %236, %239 : vector<8x128xf32>
    %cst_86 = arith.constant -1.000000e+30 : f32
    %241 = vector.broadcast %cst_86 : f32 to vector<8x128xf32>
    %242 = arith.select %240, %241, %236 : vector<8x128xi1>, vector<8x128xf32>
    %cst_87 = arith.constant dense<0xFF800000> : vector<8xf32>
    %243 = vector.multi_reduction <maximumf>, %242, %cst_87 [1] : vector<8x128xf32> to vector<8xf32>
    %244 = vector.shape_cast %243 : vector<8xf32> to vector<8x1xf32>
    %245 = vector.broadcast %244 : vector<8x1xf32> to vector<8x128xf32>
    %246 = arith.cmpf oeq, %242, %245 : vector<8x128xf32>
    %cst_88 = arith.constant -1.000000e+30 : f32
    %247 = vector.broadcast %cst_88 : f32 to vector<8x128xf32>
    %248 = arith.select %246, %247, %242 : vector<8x128xi1>, vector<8x128xf32>
    %cst_89 = arith.constant -1.000000e+30 : f32
    %249 = vector.broadcast %cst_89 : f32 to vector<8x128xf32>
    %250 = arith.cmpf oeq, %248, %249 : vector<8x128xf32>
    %251 = vector.broadcast %202 : vector<8x1xf32> to vector<8x128xf32>
    %252 = arith.subf %200, %251 : vector<8x128xf32>
    %253 = math.exp %252 : vector<8x128xf32>
    %cst_90 = arith.constant 0.000000e+00 : f32
    %254 = vector.broadcast %cst_90 : f32 to vector<8x128xf32>
    %255 = arith.select %250, %253, %254 : vector<8x128xi1>, vector<8x128xf32>
    %cst_91 = arith.constant dense<0.000000e+00> : vector<8xf32>
    %256 = vector.multi_reduction <add>, %255, %cst_91 [1] : vector<8x128xf32> to vector<8xf32>
    %257 = vector.shape_cast %256 : vector<8xf32> to vector<8x1xf32>
    %258 = tpu.reciprocal %257 : vector<8x1xf32> -> vector<8x1xf32>
    %259 = vector.broadcast %258 : vector<8x1xf32> to vector<8x128xf32>
    %260 = arith.mulf %255, %259 : vector<8x128xf32>
    %c3 = arith.constant 3 : index
    %c0_92 = arith.constant 0 : index
    %c0_93 = arith.constant 0 : index
    %261 = vector.load %arg3[%c3, %c0_92, %c0_93] : memref<4x128x16xf32, #tpu.memory_space<vmem>>, vector<1x128x16xf32>
    %262 = vector.shape_cast %261 : vector<1x128x16xf32> to vector<128x16xf32>
    %cst_94 = arith.constant dense<0.000000e+00> : vector<8x16xf32>
    %263 = tpu.matmul %260, %262, %cst_94 {dimension_numbers = #tpu.dot_dimension_numbers<[1], [0], [0], [1], [0, 0, 1, 1], [], []>} : vector<8x128xf32>, vector<128x16xf32>, vector<8x16xf32> -> vector<8x16xf32>
    %264 = arith.addf %263, %4 : vector<8x16xf32>
    %265 = tpu.concatenate %69, %134, %199, %264 in 1 : vector<8x16xf32>, vector<8x16xf32>, vector<8x16xf32>, vector<8x16xf32> -> vector<8x64xf32>
    %c0_95 = arith.constant 0 : index
    %c0_96 = arith.constant 0 : index
    %266 = vector.load %arg5[%c0_95, %c0_96] : memref<8x64xf32, #tpu.memory_space<vmem>>, vector<8x64xf32>
    tpu.vector_store %arg5[%c0_95, %c0_96], %265 {strides = array<i32>} : memref<8x64xf32, #tpu.memory_space<vmem>>, vector<8x64xf32>,
    return
  }
  func.func @transform_0(%arg0: i32) -> (i32, i32) {
    %c0_i32 = arith.constant 0 : i32
    %c0_i32_0 = arith.constant 0 : i32
    return %arg0, %c0_i32 : i32, i32
  }
  func.func @transform_1(%arg0: i32) -> (i32, i32) {
    %c0_i32 = arith.constant 0 : i32
    %c0_i32_0 = arith.constant 0 : i32
    %c0_i32_1 = arith.constant 0 : i32
    return %c0_i32, %c0_i32_0 : i32, i32
  }
  func.func @transform_2(%arg0: i32) -> (i32, i32, i32) {
    %c0_i32 = arith.constant 0 : i32
    %c0_i32_0 = arith.constant 0 : i32
    %c0_i32_1 = arith.constant 0 : i32
    %c0_i32_2 = arith.constant 0 : i32
    return %c0_i32, %c0_i32_0, %c0_i32_1 : i32, i32, i32
  }
  func.func @transform_3(%arg0: i32) -> (i32, i32) {
    %c0_i32 = arith.constant 0 : i32
    %c0_i32_0 = arith.constant 0 : i32
    %c0_i32_1 = arith.constant 0 : i32
    return %c0_i32, %c0_i32_0 : i32, i32
  }
  func.func @transform_4(%arg0: i32) -> (i32, i32) {
    %c0_i32 = arith.constant 0 : i32
    %c0_i32_0 = arith.constant 0 : i32
    return %arg0, %c0_i32 : i32, i32
  }
}

</mosaic_0001>

<llo_original>
// kernel: tpu_custom_call.1
$region0: #{tpu_custom_call.1}
  #allocation0 [shape = 'u32[]', space=smem, size = 0x4, offset = 0x4, fixed_abs, tag = 'smem constant byte address 0x4 - core index']
  #allocation1 [shape = 'u32[144,128]{1,0:T(1,128)}', space=vmem, size = 0x12000, scoped, tag = 'internal scratch']
  %s0 = inlined_call_operand.vmem [shape: f32[8,40], index: 0, kind: input, shape index: {}]
  %s1 = inlined_call_operand.vmem [shape: f32[40,512], index: 1, kind: input, shape index: {}]
  %s2 = inlined_call_operand.vmem [shape: f32[4,128,16], index: 2, kind: input, shape index: {}]
  %s3 = inlined_call_operand.vmem [shape: f32[40,16], index: 3, kind: input, shape index: {}]
  %s4 = inlined_call_operand.hbm [shape: f32[8,64], index: 4, kind: output, shape index: {}]
  %s5 = sld [smem:[#allocation0]]
  $region26: #{tpu_custom_call.1} parent=0
    _
  %s7 = ssub.s32 1, %s5
  %s8 = scalar_select 0, %s7, %s5
  $region1: #{tpu_custom_call.1} parent=0
    #allocation2 [shape = 'u8[4096]{0}', space=vmem, size = 0x1000, scoped, tag = 'output window, operand 0, single buffered']
    #allocation3 [shape = 's32[1]{0}', space=sflag, size = 0x4, scoped, tag = 'scoped memory for tpu_custom_call.1']
    %9 = vsyncpa [#allocation3], 0
    // Predicated region
    $region2: #{tpu_custom_call.1} parent=1 // pred_check
      _
    $region3: #{tpu_custom_call.1} parent=1 // pred_check_branch
      %11 = sbr.rel (0) target = $region5
    $region4: #{tpu_custom_call.1} parent=1 // pred_region
      _
    $region5: #{tpu_custom_call.1} parent=1 // pred_fallthru
      _
    // Predicated region
    $region6: #{tpu_custom_call.1} parent=1 // pred_check
      _
    $region7: #{tpu_custom_call.1} parent=1 // pred_check_branch
      %13 = sbr.rel (0) target = $region9
    $region8: #{tpu_custom_call.1} parent=1 // pred_region
      _
    $region9: #{tpu_custom_call.1} parent=1 // pred_fallthru
      _
    // Predicated region
    $region10: #{tpu_custom_call.1} parent=1 // pred_check
      _
    $region11: #{tpu_custom_call.1} parent=1 // pred_check_branch
      %15 = sbr.rel (0) target = $region13
    $region12: #{tpu_custom_call.1} parent=1 // pred_region
      _
    $region13: #{tpu_custom_call.1} parent=1 // pred_fallthru
      _
    // Predicated region
    $region14: #{tpu_custom_call.1} parent=1 // pred_check
      _
    $region15: #{tpu_custom_call.1} parent=1 // pred_check_branch
      %17 = sbr.rel (0) target = $region17
    $region16: #{tpu_custom_call.1} parent=1 // pred_region
      _
    $region17: #{tpu_custom_call.1} parent=1 // pred_fallthru
      _
    %v18 = vld [vmem:[%s0] sm:$0xff]
    %v19 = vld [vmem:[%s1] sm:$0xff]
    %v20 = vld [vmem:[%s1 + $0x8] sm:$0xff]
    %v21 = vld [vmem:[%s1 + $0x10] sm:$0xff]
    %v22 = vld [vmem:[%s1 + $0x18] sm:$0xff]
    %v23 = vld [vmem:[%s1 + $0x20] sm:$0xff]
    %v24 = vld [vmem:[%s1 + $0x28] sm:$0xff]
    %v25 = vld [vmem:[%s1 + $0x30] sm:$0xff]
    %v26 = vld [vmem:[%s1 + $0x38] sm:$0xff]
    %v27 = vld [vmem:[%s1 + $0x40] sm:$0xff]
    %v28 = vld [vmem:[%s1 + $0x48] sm:$0xff]
    %v29 = vld [vmem:[%s1 + $0x50] sm:$0xff]
    %v30 = vld [vmem:[%s1 + $0x58] sm:$0xff]
    %v31 = vld [vmem:[%s1 + $0x60] sm:$0xff]
    %v32 = vld [vmem:[%s1 + $0x68] sm:$0xff]
    %v33 = vld [vmem:[%s1 + $0x70] sm:$0xff]
    %v34 = vld [vmem:[%s1 + $0x78] sm:$0xff]
    %v35 = vld [vmem:[%s1 + $0x80] sm:$0xff]
    %v36 = vld [vmem:[%s1 + $0x88] sm:$0xff]
    %v37 = vld [vmem:[%s1 + $0x90] sm:$0xff]
    %v38 = vld [vmem:[%s1 + $0x98] sm:$0xff]
    %vm39 = vcmask 326656
    %v41 = vsel %vm39, %v18, 0
    %43 = vmatprep.subr.mxu0 0.0
    %44 = vmatpush1.msra.mxu0 0.0
    %45 = vmatprep.subr.mxu0 0.0
    %46 = vmatpush1.msra.mxu0 0.0
    %47 = vmatprep.subr.mxu0 0.0
    %48 = vmatpush1.msra.mxu0 0.0
    %49 = vmatprep.subr.mxu0 0.0
    %50 = vmatpush1.msra.mxu0 0.0
    %51 = vmatprep.subr.mxu0 0.0
    %52 = vmatpush1.msra.mxu0 0.0
    %53 = vmatprep.subr.mxu0 0.0
    %54 = vmatpush1.msra.mxu0 0.0
    %55 = vmatprep.subr.mxu0 0.0
    %56 = vmatpush1.msra.mxu0 0.0
    %57 = vmatprep.subr.mxu0 0.0
    %58 = vmatpush1.msra.mxu0 0.0
    %59 = vmatprep.subr.mxu0 0.0
    %60 = vmatpush1.msra.mxu0 0.0
    %61 = vmatprep.subr.mxu0 0.0
    %62 = vmatpush1.msra.mxu0 0.0
    %63 = vmatprep.subr.mxu0 0.0
    %64 = vmatpush1.msra.mxu0 0.0
    %65 = vmatprep.subr.mxu0 %v36
    %66 = vmatpush1.msra.mxu0 %v35
    %67 = vmatprep.subr.mxu0 %v32
    %68 = vmatpush1.msra.mxu0 %v31
    %69 = vmatprep.subr.mxu0 %v28
    %70 = vmatpush1.msra.mxu0 %v27
    %71 = vmatprep.subr.mxu0 %v24
    %72 = vmatpush1.msra.mxu0 %v23
    %73 = vmatprep.subr.mxu0 %v20
    %74 = vmatpush1.msra.mxu0 %v19
    %75 = vmatprep.subr.mxu0 0.0
    %76 = vmatpush2.msra.mxu0 0.0
    %77 = vmatprep.subr.mxu0 0.0
    %78 = vmatpush2.msra.mxu0 0.0
    %79 = vmatprep.subr.mxu0 0.0
    %80 = vmatpush2.msra.mxu0 0.0
    %81 = vmatprep.subr.mxu0 0.0
    %82 = vmatpush2.msra.mxu0 0.0
    %83 = vmatprep.subr.mxu0 0.0
    %84 = vmatpush2.msra.mxu0 0.0
    %85 = vmatprep.subr.mxu0 0.0
    %86 = vmatpush2.msra.mxu0 0.0
    %87 = vmatprep.subr.mxu0 0.0
    %88 = vmatpush2.msra.mxu0 0.0
    %89 = vmatprep.subr.mxu0 0.0
    %90 = vmatpush2.msra.mxu0 0.0
    %91 = vmatprep.subr.mxu0 0.0
    %92 = vmatpush2.msra.mxu0 0.0
    %93 = vmatprep.subr.mxu0 0.0
    %94 = vmatpush2.msra.mxu0 0.0
    %95 = vmatprep.subr.mxu0 0.0
    %96 = vmatpush2.msra.mxu0 0.0
    %97 = vmatprep.subr.mxu0 0.0
    %98 = vmatpush2.msra.mxu0 0.0
    %99 = vmatprep.subr.mxu0 0.0
    %100 = vmatpush2.msra.mxu0 0.0
    %101 = vmatprep.subr.mxu0 0.0
    %102 = vmatpush2.msra.mxu0 0.0
    %103 = vmatprep.subr.mxu0 0.0
    %104 = vmatpush2.msra.mxu0 0.0
    %105 = vmatprep.subr.mxu0 0.0
    %106 = vmatpush2.msra.mxu0 0.0
    %107 = vmatprep.mubr.f32.mxu0 0.0
    %108 = vmatmul.mubr.f32.gmra.mxu0 %v41
    %v109 = vpop.f32.mrf.mxu0
    %v110 = vadd.f32 0.0, %v109
    %v111 = vpop.f32.mrf.mxu0
    %v112 = vadd.f32 0.0, %v111
    %113 = vdwg.mxu0
    %114 = vmatprep.subr.mxu0 0.0
    %115 = vmatpush1.msra.mxu0 0.0
    %116 = vmatprep.subr.mxu0 0.0
    %117 = vmatpush1.msra.mxu0 0.0
    %118 = vmatprep.subr.mxu0 0.0
    %119 = vmatpush1.msra.mxu0 0.0
    %120 = vmatprep.subr.mxu0 0.0
    %121 = vmatpush1.msra.mxu0 0.0
    %122 = vmatprep.subr.mxu0 0.0
    %123 = vmatpush1.msra.mxu0 0.0
    %124 = vmatprep.subr.mxu0 0.0
    %125 = vmatpush1.msra.mxu0 0.0
    %126 = vmatprep.subr.mxu0 0.0
    %127 = vmatpush1.msra.mxu0 0.0
    %128 = vmatprep.subr.mxu0 0.0
    %129 = vmatpush1.msra.mxu0 0.0
    %130 = vmatprep.subr.mxu0 0.0
    %131 = vmatpush1.msra.mxu0 0.0
    %132 = vmatprep.subr.mxu0 0.0
    %133 = vmatpush1.msra.mxu0 0.0
    %134 = vmatprep.subr.mxu0 0.0
    %135 = vmatpush1.msra.mxu0 0.0
    %136 = vmatprep.subr.mxu0 %v38
    %137 = vmatpush1.msra.mxu0 %v37
    %138 = vmatprep.subr.mxu0 %v34
    %139 = vmatpush1.msra.mxu0 %v33
    %140 = vmatprep.subr.mxu0 %v30
    %141 = vmatpush1.msra.mxu0 %v29
    %142 = vmatprep.subr.mxu0 %v26
    %143 = vmatpush1.msra.mxu0 %v25
    %144 = vmatprep.subr.mxu0 %v22
    %145 = vmatpush1.msra.mxu0 %v21
    %146 = vmatprep.subr.mxu0 0.0
    %147 = vmatpush2.msra.mxu0 0.0
    %148 = vmatprep.subr.mxu0 0.0
    %149 = vmatpush2.msra.mxu0 0.0
    %150 = vmatprep.subr.mxu0 0.0
    %151 = vmatpush2.msra.mxu0 0.0
    %152 = vmatprep.subr.mxu0 0.0
    %153 = vmatpush2.msra.mxu0 0.0
    %154 = vmatprep.subr.mxu0 0.0
    %155 = vmatpush2.msra.mxu0 0.0
    %156 = vmatprep.subr.mxu0 0.0
    %157 = vmatpush2.msra.mxu0 0.0
    %158 = vmatprep.subr.mxu0 0.0
    %159 = vmatpush2.msra.mxu0 0.0
    %160 = vmatprep.subr.mxu0 0.0
    %161 = vmatpush2.msra.mxu0 0.0
    %162 = vmatprep.subr.mxu0 0.0
    %163 = vmatpush2.msra.mxu0 0.0
    %164 = vmatprep.subr.mxu0 0.0
    %165 = vmatpush2.msra.mxu0 0.0
    %166 = vmatprep.subr.mxu0 0.0
    %167 = vmatpush2.msra.mxu0 0.0
    %168 = vmatprep.subr.mxu0 0.0
    %169 = vmatpush2.msra.mxu0 0.0
    %170 = vmatprep.subr.mxu0 0.0
    %171 = vmatpush2.msra.mxu0 0.0
    %172 = vmatprep.subr.mxu0 0.0
    %173 = vmatpush2.msra.mxu0 0.0
    %174 = vmatprep.subr.mxu0 0.0
    %175 = vmatpush2.msra.mxu0 0.0
    %176 = vmatprep.subr.mxu0 0.0
    %177 = vmatpush2.msra.mxu0 0.0
    %178 = vmatprep.mubr.f32.mxu0 0.0
    %179 = vmatmul.mubr.f32.gmra.mxu0 %v41
    %v180 = vpop.f32.mrf.mxu0
    %v181 = vadd.f32 0.0, %v180
    %v182 = vpop.f32.mrf.mxu0
    %v183 = vadd.f32 0.0, %v182
    %184 = vdwg.mxu0
    %v185 = vld [vmem:[%s3] sm:$0xff]
    %v186 = vld [vmem:[%s3 + $0x8] sm:$0xff]
    %v187 = vld [vmem:[%s3 + $0x10] sm:$0xff]
    %v188 = vld [vmem:[%s3 + $0x18] sm:$0xff]
    %v189 = vld [vmem:[%s3 + $0x20] sm:$0xff]
    %190 = vmatprep.subr.mxu0 0.0
    %191 = vmatpush1.msra.mxu0 0.0
    %192 = vmatprep.subr.mxu0 0.0
    %193 = vmatpush1.msra.mxu0 0.0
    %194 = vmatprep.subr.mxu0 0.0
    %195 = vmatpush1.msra.mxu0 0.0
    %196 = vmatprep.subr.mxu0 0.0
    %197 = vmatpush1.msra.mxu0 0.0
    %198 = vmatprep.subr.mxu0 0.0
    %199 = vmatpush1.msra.mxu0 0.0
    %200 = vmatprep.subr.mxu0 0.0
    %201 = vmatpush1.msra.mxu0 0.0
    %202 = vmatprep.subr.mxu0 0.0
    %203 = vmatpush1.msra.mxu0 0.0
    %204 = vmatprep.subr.mxu0 0.0
    %205 = vmatpush1.msra.mxu0 0.0
    %206 = vmatprep.subr.mxu0 0.0
    %207 = vmatpush1.msra.mxu0 0.0
    %208 = vmatprep.subr.mxu0 0.0
    %209 = vmatpush1.msra.mxu0 0.0
    %210 = vmatprep.subr.mxu0 0.0
    %211 = vmatpush1.msra.mxu0 0.0
    %212 = vmatprep.subr.mxu0 0.0
    %213 = vmatpush1.msra.mxu0 %v189
    %214 = vmatprep.subr.mxu0 0.0
    %215 = vmatpush1.msra.mxu0 %v188
    %216 = vmatprep.subr.mxu0 0.0
    %217 = vmatpush1.msra.mxu0 %v187
    %218 = vmatprep.subr.mxu0 0.0
    %219 = vmatpush1.msra.mxu0 %v186
    %220 = vmatprep.subr.mxu0 0.0
    %221 = vmatpush1.msra.mxu0 %v185
    %222 = vmatprep.subr.mxu0 0.0
    %223 = vmatpush2.msra.mxu0 0.0
    %224 = vmatprep.subr.mxu0 0.0
    %225 = vmatpush2.msra.mxu0 0.0
    %226 = vmatprep.subr.mxu0 0.0
    %227 = vmatpush2.msra.mxu0 0.0
    %228 = vmatprep.subr.mxu0 0.0
    %229 = vmatpush2.msra.mxu0 0.0
    %230 = vmatprep.subr.mxu0 0.0
    %231 = vmatpush2.msra.mxu0 0.0
    %232 = vmatprep.subr.mxu0 0.0
    %233 = vmatpush2.msra.mxu0 0.0
    %234 = vmatprep.subr.mxu0 0.0
    %235 = vmatpush2.msra.mxu0 0.0
    %236 = vmatprep.subr.mxu0 0.0
    %237 = vmatpush2.msra.mxu0 0.0
    %238 = vmatprep.subr.mxu0 0.0
    %239 = vmatpush2.msra.mxu0 0.0
    %240 = vmatprep.subr.mxu0 0.0
    %241 = vmatpush2.msra.mxu0 0.0
    %242 = vmatprep.subr.mxu0 0.0
    %243 = vmatpush2.msra.mxu0 0.0
    %244 = vmatprep.subr.mxu0 0.0
    %245 = vmatpush2.msra.mxu0 0.0
    %246 = vmatprep.subr.mxu0 0.0
    %247 = vmatpush2.msra.mxu0 0.0
    %248 = vmatprep.subr.mxu0 0.0
    %249 = vmatpush2.msra.mxu0 0.0
    %250 = vmatprep.subr.mxu0 0.0
    %251 = vmatpush2.msra.mxu0 0.0
    %252 = vmatprep.subr.mxu0 0.0
    %253 = vmatpush2.msra.mxu0 0.0
    %254 = vmatprep.mubr.f32.mxu0 0.0
    %255 = vmatmul.mubr.f32.gmra.mxu0 %v41
    %v256 = vpop.f32.mrf.mxu0
    %v257 = vadd.f32 0.0, %v256
    %v258 = vpop.f32.mrf.mxu0
    %259 = vdwg.mxu0
    %260 = vmax.xlane.f32.xlu0 %v110
    %v261 = vpop.xlane.xlu0 %260
    %vm262 = vcmp.eq.f32.partialorder %v110, %v261
    %v263 = vsel %vm262, -1e+30, %v110
    %264 = vmax.xlane.f32.xlu0 %v263
    %v265 = vpop.xlane.xlu0 %264
    %vm266 = vcmp.eq.f32.partialorder %v263, %v265
    %v267 = vsel %vm266, -1e+30, %v263
    %268 = vmax.xlane.f32.xlu0 %v267
    %v269 = vpop.xlane.xlu0 %268
    %vm270 = vcmp.eq.f32.partialorder %v267, %v269
    %v271 = vsel %vm270, -1e+30, %v267
    %272 = vmax.xlane.f32.xlu0 %v271
    %v273 = vpop.xlane.xlu0 %272
    %vm274 = vcmp.eq.f32.partialorder %v271, %v273
    %v275 = vsel %vm274, -1e+30, %v271
    %276 = vmax.xlane.f32.xlu0 %v275
    %v277 = vpop.xlane.xlu0 %276
    %vm278 = vcmp.eq.f32.partialorder %v275, %v277
    %v279 = vsel %vm278, -1e+30, %v275
    %280 = vmax.xlane.f32.xlu0 %v279
    %v281 = vpop.xlane.xlu0 %280
    %vm282 = vcmp.eq.f32.partialorder %v279, %v281
    %v283 = vsel %vm282, -1e+30, %v279
    %284 = vmax.xlane.f32.xlu0 %v283
    %v285 = vpop.xlane.xlu0 %284
    %vm286 = vcmp.eq.f32.partialorder %v283, %v285
    %v287 = vsel %vm286, -1e+30, %v283
    %288 = vmax.xlane.f32.xlu0 %v287
    %v289 = vpop.xlane.xlu0 %288
    %vm290 = vcmp.eq.f32.partialorder %v287, %v289
    %v291 = vsel %vm290, -1e+30, %v287
    %vm292 = vcmp.eq.f32.partialorder %v291, -1e+30
    %v293 = vsub.f32 %v110, %v261
    %v294 = vmul.f32 %v293, 1.442695
    %v295 = vpow.pop %v294
    %v296 = vsel %vm292, %v295, 0.0
    %297 = vadd.xlane.f32.xlu0 %v296
    %v298 = vpop.xlane.xlu0 %297
    %v299 = vrcp.pop %v298
    %v300 = vmul.f32 %v296, %v299
    %v301 = vld [vmem:[%s2] sm:$0xff]
    %v302 = vld [vmem:[%s2 + $0x8] sm:$0xff]
    %v303 = vld [vmem:[%s2 + $0x10] sm:$0xff]
    %v304 = vld [vmem:[%s2 + $0x18] sm:$0xff]
    %v305 = vld [vmem:[%s2 + $0x20] sm:$0xff]
    %v306 = vld [vmem:[%s2 + $0x28] sm:$0xff]
    %v307 = vld [vmem:[%s2 + $0x30] sm:$0xff]
    %v308 = vld [vmem:[%s2 + $0x38] sm:$0xff]
    %v309 = vld [vmem:[%s2 + $0x40] sm:$0xff]
    %v310 = vld [vmem:[%s2 + $0x48] sm:$0xff]
    %v311 = vld [vmem:[%s2 + $0x50] sm:$0xff]
    %v312 = vld [vmem:[%s2 + $0x58] sm:$0xff]
    %v313 = vld [vmem:[%s2 + $0x60] sm:$0xff]
    %v314 = vld [vmem:[%s2 + $0x68] sm:$0xff]
    %v315 = vld [vmem:[%s2 + $0x70] sm:$0xff]
    %v316 = vld [vmem:[%s2 + $0x78] sm:$0xff]
    %317 = vmatprep.subr.mxu0 0.0
    %318 = vmatpush1.msra.mxu0 %v316
    %319 = vmatprep.subr.mxu0 0.0
    %320 = vmatpush1.msra.mxu0 %v315
    %321 = vmatprep.subr.mxu0 0.0
    %322 = vmatpush1.msra.mxu0 %v314
    %323 = vmatprep.subr.mxu0 0.0
    %324 = vmatpush1.msra.mxu0 %v313
    %325 = vmatprep.subr.mxu0 0.0
    %326 = vmatpush1.msra.mxu0 %v312
    %327 = vmatprep.subr.mxu0 0.0
    %328 = vmatpush1.msra.mxu0 %v311
    %329 = vmatprep.subr.mxu0 0.0
    %330 = vmatpush1.msra.mxu0 %v310
    %331 = vmatprep.subr.mxu0 0.0
    %332 = vmatpush1.msra.mxu0 %v309
    %333 = vmatprep.subr.mxu0 0.0
    %334 = vmatpush1.msra.mxu0 %v308
    %335 = vmatprep.subr.mxu0 0.0
    %336 = vmatpush1.msra.mxu0 %v307
    %337 = vmatprep.subr.mxu0 0.0
    %338 = vmatpush1.msra.mxu0 %v306
    %339 = vmatprep.subr.mxu0 0.0
    %340 = vmatpush1.msra.mxu0 %v305
    %341 = vmatprep.subr.mxu0 0.0
    %342 = vmatpush1.msra.mxu0 %v304
    %343 = vmatprep.subr.mxu0 0.0
    %344 = vmatpush1.msra.mxu0 %v303
    %345 = vmatprep.subr.mxu0 0.0
    %346 = vmatpush1.msra.mxu0 %v302
    %347 = vmatprep.subr.mxu0 0.0
    %348 = vmatpush1.msra.mxu0 %v301
    %349 = vmatprep.subr.mxu0 0.0
    %350 = vmatpush2.msra.mxu0 0.0
    %351 = vmatprep.subr.mxu0 0.0
    %352 = vmatpush2.msra.mxu0 0.0
    %353 = vmatprep.subr.mxu0 0.0
    %354 = vmatpush2.msra.mxu0 0.0
    %355 = vmatprep.subr.mxu0 0.0
    %356 = vmatpush2.msra.mxu0 0.0
    %357 = vmatprep.subr.mxu0 0.0
    %358 = vmatpush2.msra.mxu0 0.0
    %359 = vmatprep.subr.mxu0 0.0
    %360 = vmatpush2.msra.mxu0 0.0
    %361 = vmatprep.subr.mxu0 0.0
    %362 = vmatpush2.msra.mxu0 0.0
    %363 = vmatprep.subr.mxu0 0.0
    %364 = vmatpush2.msra.mxu0 0.0
    %365 = vmatprep.subr.mxu0 0.0
    %366 = vmatpush2.msra.mxu0 0.0
    %367 = vmatprep.subr.mxu0 0.0
    %368 = vmatpush2.msra.mxu0 0.0
    %369 = vmatprep.subr.mxu0 0.0
    %370 = vmatpush2.msra.mxu0 0.0
    %371 = vmatprep.subr.mxu0 0.0
    %372 = vmatpush2.msra.mxu0 0.0
    %373 = vmatprep.subr.mxu0 0.0
    %374 = vmatpush2.msra.mxu0 0.0
    %375 = vmatprep.subr.mxu0 0.0
    %376 = vmatpush2.msra.mxu0 0.0
    %377 = vmatprep.subr.mxu0 0.0
    %378 = vmatpush2.msra.mxu0 0.0
    %379 = vmatprep.subr.mxu0 0.0
    %380 = vmatpush2.msra.mxu0 0.0
    %381 = vmatprep.mubr.f32.mxu0 0.0
    %382 = vmatmul.mubr.f32.gmra.mxu0 %v300
    %v383 = vpop.f32.mrf.mxu0
    %v384 = vadd.f32 %v257, %v383
    %v385 = vpop.f32.mrf.mxu0
    %386 = vdwg.mxu0
    %387 = vmax.xlane.f32.xlu0 %v112
    %v388 = vpop.xlane.xlu0 %387
    %vm389 = vcmp.eq.f32.partialorder %v112, %v388
    %v390 = vsel %vm389, -1e+30, %v112
    %391 = vmax.xlane.f32.xlu0 %v390
    %v392 = vpop.xlane.xlu0 %391
    %vm393 = vcmp.eq.f32.partialorder %v390, %v392
    %v394 = vsel %vm393, -1e+30, %v390
    %395 = vmax.xlane.f32.xlu0 %v394
    %v396 = vpop.xlane.xlu0 %395
    %vm397 = vcmp.eq.f32.partialorder %v394, %v396
    %v398 = vsel %vm397, -1e+30, %v394
    %399 = vmax.xlane.f32.xlu0 %v398
    %v400 = vpop.xlane.xlu0 %399
    %vm401 = vcmp.eq.f32.partialorder %v398, %v400
    %v402 = vsel %vm401, -1e+30, %v398
    %403 = vmax.xlane.f32.xlu0 %v402
    %v404 = vpop.xlane.xlu0 %403
    %vm405 = vcmp.eq.f32.partialorder %v402, %v404
    %v406 = vsel %vm405, -1e+30, %v402
    %407 = vmax.xlane.f32.xlu0 %v406
    %v408 = vpop.xlane.xlu0 %407
    %vm409 = vcmp.eq.f32.partialorder %v406, %v408
    %v410 = vsel %vm409, -1e+30, %v406
    %411 = vmax.xlane.f32.xlu0 %v410
    %v412 = vpop.xlane.xlu0 %411
    %vm413 = vcmp.eq.f32.partialorder %v410, %v412
    %v414 = vsel %vm413, -1e+30, %v410
    %415 = vmax.xlane.f32.xlu0 %v414
    %v416 = vpop.xlane.xlu0 %415
    %vm417 = vcmp.eq.f32.partialorder %v414, %v416
    %v418 = vsel %vm417, -1e+30, %v414
    %vm419 = vcmp.eq.f32.partialorder %v418, -1e+30
    %v420 = vsub.f32 %v112, %v388
    %v421 = vmul.f32 %v420, 1.442695
    %v422 = vpow.pop %v421
    %v423 = vsel %vm419, %v422, 0.0
    %424 = vadd.xlane.f32.xlu0 %v423
    %v425 = vpop.xlane.xlu0 %424
    %v426 = vrcp.pop %v425
    %v427 = vmul.f32 %v423, %v426
    %s428 = scalar_lea.vmem %s2, 128
    %v429 = vld [vmem:[%s428] sm:$0xff]
    %v430 = vld [vmem:[%s428 + $0x8] sm:$0xff]
    %v431 = vld [vmem:[%s428 + $0x10] sm:$0xff]
    %v432 = vld [vmem:[%s428 + $0x18] sm:$0xff]
    %v433 = vld [vmem:[%s428 + $0x20] sm:$0xff]
    %v434 = vld [vmem:[%s428 + $0x28] sm:$0xff]
    %v435 = vld [vmem:[%s428 + $0x30] sm:$0xff]
    %v436 = vld [vmem:[%s428 + $0x38] sm:$0xff]
    %v437 = vld [vmem:[%s428 + $0x40] sm:$0xff]
    %v438 = vld [vmem:[%s428 + $0x48] sm:$0xff]
    %v439 = vld [vmem:[%s428 + $0x50] sm:$0xff]
    %v440 = vld [vmem:[%s428 + $0x58] sm:$0xff]
    %v441 = vld [vmem:[%s428 + $0x60] sm:$0xff]
    %v442 = vld [vmem:[%s428 + $0x68] sm:$0xff]
    %v443 = vld [vmem:[%s428 + $0x70] sm:$0xff]
    %v444 = vld [vmem:[%s428 + $0x78] sm:$0xff]
    %445 = vmatprep.subr.mxu0 0.0
    %446 = vmatpush1.msra.mxu0 %v444
    %447 = vmatprep.subr.mxu0 0.0
    %448 = vmatpush1.msra.mxu0 %v443
    %449 = vmatprep.subr.mxu0 0.0
    %450 = vmatpush1.msra.mxu0 %v442
    %451 = vmatprep.subr.mxu0 0.0
    %452 = vmatpush1.msra.mxu0 %v441
    %453 = vmatprep.subr.mxu0 0.0
    %454 = vmatpush1.msra.mxu0 %v440
    %455 = vmatprep.subr.mxu0 0.0
    %456 = vmatpush1.msra.mxu0 %v439
    %457 = vmatprep.subr.mxu0 0.0
    %458 = vmatpush1.msra.mxu0 %v438
    %459 = vmatprep.subr.mxu0 0.0
    %460 = vmatpush1.msra.mxu0 %v437
    %461 = vmatprep.subr.mxu0 0.0
    %462 = vmatpush1.msra.mxu0 %v436
    %463 = vmatprep.subr.mxu0 0.0
    %464 = vmatpush1.msra.mxu0 %v435
    %465 = vmatprep.subr.mxu0 0.0
    %466 = vmatpush1.msra.mxu0 %v434
    %467 = vmatprep.subr.mxu0 0.0
    %468 = vmatpush1.msra.mxu0 %v433
    %469 = vmatprep.subr.mxu0 0.0
    %470 = vmatpush1.msra.mxu0 %v432
    %471 = vmatprep.subr.mxu0 0.0
    %472 = vmatpush1.msra.mxu0 %v431
    %473 = vmatprep.subr.mxu0 0.0
    %474 = vmatpush1.msra.mxu0 %v430
    %475 = vmatprep.subr.mxu0 0.0
    %476 = vmatpush1.msra.mxu0 %v429
    %477 = vmatprep.subr.mxu0 0.0
    %478 = vmatpush2.msra.mxu0 0.0
    %479 = vmatprep.subr.mxu0 0.0
    %480 = vmatpush2.msra.mxu0 0.0
    %481 = vmatprep.subr.mxu0 0.0
    %482 = vmatpush2.msra.mxu0 0.0
    %483 = vmatprep.subr.mxu0 0.0
    %484 = vmatpush2.msra.mxu0 0.0
    %485 = vmatprep.subr.mxu0 0.0
    %486 = vmatpush2.msra.mxu0 0.0
    %487 = vmatprep.subr.mxu0 0.0
    %488 = vmatpush2.msra.mxu0 0.0
    %489 = vmatprep.subr.mxu0 0.0
    %490 = vmatpush2.msra.mxu0 0.0
    %491 = vmatprep.subr.mxu0 0.0
    %492 = vmatpush2.msra.mxu0 0.0
    %493 = vmatprep.subr.mxu0 0.0
    %494 = vmatpush2.msra.mxu0 0.0
    %495 = vmatprep.subr.mxu0 0.0
    %496 = vmatpush2.msra.mxu0 0.0
    %497 = vmatprep.subr.mxu0 0.0
    %498 = vmatpush2.msra.mxu0 0.0
    %499 = vmatprep.subr.mxu0 0.0
    %500 = vmatpush2.msra.mxu0 0.0
    %501 = vmatprep.subr.mxu0 0.0
    %502 = vmatpush2.msra.mxu0 0.0
    %503 = vmatprep.subr.mxu0 0.0
    %504 = vmatpush2.msra.mxu0 0.0
    %505 = vmatprep.subr.mxu0 0.0
    %506 = vmatpush2.msra.mxu0 0.0
    %507 = vmatprep.subr.mxu0 0.0
    %508 = vmatpush2.msra.mxu0 0.0
    %509 = vmatprep.mubr.f32.mxu0 0.0
    %510 = vmatmul.mubr.f32.gmra.mxu0 %v427
    %v511 = vpop.f32.mrf.mxu0
    %v512 = vadd.f32 %v257, %v511
    %v513 = vpop.f32.mrf.mxu0
    %514 = vdwg.mxu0
    %515 = vmax.xlane.f32.xlu0 %v181
    %v516 = vpop.xlane.xlu0 %515
    %vm517 = vcmp.eq.f32.partialorder %v181, %v516
    %v518 = vsel %vm517, -1e+30, %v181
    %519 = vmax.xlane.f32.xlu0 %v518
    %v520 = vpop.xlane.xlu0 %519
    %vm521 = vcmp.eq.f32.partialorder %v518, %v520
    %v522 = vsel %vm521, -1e+30, %v518
    %523 = vmax.xlane.f32.xlu0 %v522
    %v524 = vpop.xlane.xlu0 %523
    %vm525 = vcmp.eq.f32.partialorder %v522, %v524
    %v526 = vsel %vm525, -1e+30, %v522
    %527 = vmax.xlane.f32.xlu0 %v526
    %v528 = vpop.xlane.xlu0 %527
    %vm529 = vcmp.eq.f32.partialorder %v526, %v528
    %v530 = vsel %vm529, -1e+30, %v526
    %531 = vmax.xlane.f32.xlu0 %v530
    %v532 = vpop.xlane.xlu0 %531
    %vm533 = vcmp.eq.f32.partialorder %v530, %v532
    %v534 = vsel %vm533, -1e+30, %v530
    %535 = vmax.xlane.f32.xlu0 %v534
    %v536 = vpop.xlane.xlu0 %535
    %vm537 = vcmp.eq.f32.partialorder %v534, %v536
    %v538 = vsel %vm537, -1e+30, %v534
    %539 = vmax.xlane.f32.xlu0 %v538
    %v540 = vpop.xlane.xlu0 %539
    %vm541 = vcmp.eq.f32.partialorder %v538, %v540
    %v542 = vsel %vm541, -1e+30, %v538
    %543 = vmax.xlane.f32.xlu0 %v542
    %v544 = vpop.xlane.xlu0 %543
    %vm545 = vcmp.eq.f32.partialorder %v542, %v544
    %v546 = vsel %vm545, -1e+30, %v542
    %vm547 = vcmp.eq.f32.partialorder %v546, -1e+30
    %v548 = vsub.f32 %v181, %v516
    %v549 = vmul.f32 %v548, 1.442695
    %v550 = vpow.pop %v549
    %v551 = vsel %vm547, %v550, 0.0
    %552 = vadd.xlane.f32.xlu0 %v551
    %v553 = vpop.xlane.xlu0 %552
    %v554 = vrcp.pop %v553
    %v555 = vmul.f32 %v551, %v554
    %s556 = scalar_lea.vmem %s2, 256
    %v557 = vld [vmem:[%s556] sm:$0xff]
    %v558 = vld [vmem:[%s556 + $0x8] sm:$0xff]
    %v559 = vld [vmem:[%s556 + $0x10] sm:$0xff]
    %v560 = vld [vmem:[%s556 + $0x18] sm:$0xff]
    %v561 = vld [vmem:[%s556 + $0x20] sm:$0xff]
    %v562 = vld [vmem:[%s556 + $0x28] sm:$0xff]
    %v563 = vld [vmem:[%s556 + $0x30] sm:$0xff]
    %v564 = vld [vmem:[%s556 + $0x38] sm:$0xff]
    %v565 = vld [vmem:[%s556 + $0x40] sm:$0xff]
    %v566 = vld [vmem:[%s556 + $0x48] sm:$0xff]
    %v567 = vld [vmem:[%s556 + $0x50] sm:$0xff]
    %v568 = vld [vmem:[%s556 + $0x58] sm:$0xff]
    %v569 = vld [vmem:[%s556 + $0x60] sm:$0xff]
    %v570 = vld [vmem:[%s556 + $0x68] sm:$0xff]
    %v571 = vld [vmem:[%s556 + $0x70] sm:$0xff]
    %v572 = vld [vmem:[%s556 + $0x78] sm:$0xff]
    %573 = vmatprep.subr.mxu0 0.0
    %574 = vmatpush1.msra.mxu0 %v572
    %575 = vmatprep.subr.mxu0 0.0
    %576 = vmatpush1.msra.mxu0 %v571
    %577 = vmatprep.subr.mxu0 0.0
    %578 = vmatpush1.msra.mxu0 %v570
    %579 = vmatprep.subr.mxu0 0.0
    %580 = vmatpush1.msra.mxu0 %v569
    %581 = vmatprep.subr.mxu0 0.0
    %582 = vmatpush1.msra.mxu0 %v568
    %583 = vmatprep.subr.mxu0 0.0
    %584 = vmatpush1.msra.mxu0 %v567
    %585 = vmatprep.subr.mxu0 0.0
    %586 = vmatpush1.msra.mxu0 %v566
    %587 = vmatprep.subr.mxu0 0.0
    %588 = vmatpush1.msra.mxu0 %v565
    %589 = vmatprep.subr.mxu0 0.0
    %590 = vmatpush1.msra.mxu0 %v564
    %591 = vmatprep.subr.mxu0 0.0
    %592 = vmatpush1.msra.mxu0 %v563
    %593 = vmatprep.subr.mxu0 0.0
    %594 = vmatpush1.msra.mxu0 %v562
    %595 = vmatprep.subr.mxu0 0.0
    %596 = vmatpush1.msra.mxu0 %v561
    %597 = vmatprep.subr.mxu0 0.0
    %598 = vmatpush1.msra.mxu0 %v560
    %599 = vmatprep.subr.mxu0 0.0
    %600 = vmatpush1.msra.mxu0 %v559
    %601 = vmatprep.subr.mxu0 0.0
    %602 = vmatpush1.msra.mxu0 %v558
    %603 = vmatprep.subr.mxu0 0.0
    %604 = vmatpush1.msra.mxu0 %v557
    %605 = vmatprep.subr.mxu0 0.0
    %606 = vmatpush2.msra.mxu0 0.0
    %607 = vmatprep.subr.mxu0 0.0
    %608 = vmatpush2.msra.mxu0 0.0
    %609 = vmatprep.subr.mxu0 0.0
    %610 = vmatpush2.msra.mxu0 0.0
    %611 = vmatprep.subr.mxu0 0.0
    %612 = vmatpush2.msra.mxu0 0.0
    %613 = vmatprep.subr.mxu0 0.0
    %614 = vmatpush2.msra.mxu0 0.0
    %615 = vmatprep.subr.mxu0 0.0
    %616 = vmatpush2.msra.mxu0 0.0
    %617 = vmatprep.subr.mxu0 0.0
    %618 = vmatpush2.msra.mxu0 0.0
    %619 = vmatprep.subr.mxu0 0.0
    %620 = vmatpush2.msra.mxu0 0.0
    %621 = vmatprep.subr.mxu0 0.0
    %622 = vmatpush2.msra.mxu0 0.0
    %623 = vmatprep.subr.mxu0 0.0
    %624 = vmatpush2.msra.mxu0 0.0
    %625 = vmatprep.subr.mxu0 0.0
    %626 = vmatpush2.msra.mxu0 0.0
    %627 = vmatprep.subr.mxu0 0.0
    %628 = vmatpush2.msra.mxu0 0.0
    %629 = vmatprep.subr.mxu0 0.0
    %630 = vmatpush2.msra.mxu0 0.0
    %631 = vmatprep.subr.mxu0 0.0
    %632 = vmatpush2.msra.mxu0 0.0
    %633 = vmatprep.subr.mxu0 0.0
    %634 = vmatpush2.msra.mxu0 0.0
    %635 = vmatprep.subr.mxu0 0.0
    %636 = vmatpush2.msra.mxu0 0.0
    %637 = vmatprep.mubr.f32.mxu0 0.0
    %638 = vmatmul.mubr.f32.gmra.mxu0 %v555
    %v639 = vpop.f32.mrf.mxu0
    %v640 = vadd.f32 %v257, %v639
    %v641 = vpop.f32.mrf.mxu0
    %642 = vdwg.mxu0
    %643 = vmax.xlane.f32.xlu0 %v183
    %v644 = vpop.xlane.xlu0 %643
    %vm645 = vcmp.eq.f32.partialorder %v183, %v644
    %v646 = vsel %vm645, -1e+30, %v183
    %647 = vmax.xlane.f32.xlu0 %v646
    %v648 = vpop.xlane.xlu0 %647
    %vm649 = vcmp.eq.f32.partialorder %v646, %v648
    %v650 = vsel %vm649, -1e+30, %v646
    %651 = vmax.xlane.f32.xlu0 %v650
    %v652 = vpop.xlane.xlu0 %651
    %vm653 = vcmp.eq.f32.partialorder %v650, %v652
    %v654 = vsel %vm653, -1e+30, %v650
    %655 = vmax.xlane.f32.xlu0 %v654
    %v656 = vpop.xlane.xlu0 %655
    %vm657 = vcmp.eq.f32.partialorder %v654, %v656
    %v658 = vsel %vm657, -1e+30, %v654
    %659 = vmax.xlane.f32.xlu0 %v658
    %v660 = vpop.xlane.xlu0 %659
    %vm661 = vcmp.eq.f32.partialorder %v658, %v660
    %v662 = vsel %vm661, -1e+30, %v658
    %663 = vmax.xlane.f32.xlu0 %v662
    %v664 = vpop.xlane.xlu0 %663
    %vm665 = vcmp.eq.f32.partialorder %v662, %v664
    %v666 = vsel %vm665, -1e+30, %v662
    %667 = vmax.xlane.f32.xlu0 %v666
    %v668 = vpop.xlane.xlu0 %667
    %vm669 = vcmp.eq.f32.partialorder %v666, %v668
    %v670 = vsel %vm669, -1e+30, %v666
    %671 = vmax.xlane.f32.xlu0 %v670
    %v672 = vpop.xlane.xlu0 %671
    %vm673 = vcmp.eq.f32.partialorder %v670, %v672
    %v674 = vsel %vm673, -1e+30, %v670
    %vm675 = vcmp.eq.f32.partialorder %v674, -1e+30
    %v676 = vsub.f32 %v183, %v644
    %v677 = vmul.f32 %v676, 1.442695
    %v678 = vpow.pop %v677
    %v679 = vsel %vm675, %v678, 0.0
    %680 = vadd.xlane.f32.xlu0 %v679
    %v681 = vpop.xlane.xlu0 %680
    %v682 = vrcp.pop %v681
    %v683 = vmul.f32 %v679, %v682
    %s684 = scalar_lea.vmem %s2, 384
    %v685 = vld [vmem:[%s684] sm:$0xff]
    %v686 = vld [vmem:[%s684 + $0x8] sm:$0xff]
    %v687 = vld [vmem:[%s684 + $0x10] sm:$0xff]
    %v688 = vld [vmem:[%s684 + $0x18] sm:$0xff]
    %v689 = vld [vmem:[%s684 + $0x20] sm:$0xff]
    %v690 = vld [vmem:[%s684 + $0x28] sm:$0xff]
    %v691 = vld [vmem:[%s684 + $0x30] sm:$0xff]
    %v692 = vld [vmem:[%s684 + $0x38] sm:$0xff]
    %v693 = vld [vmem:[%s684 + $0x40] sm:$0xff]
    %v694 = vld [vmem:[%s684 + $0x48] sm:$0xff]
    %v695 = vld [vmem:[%s684 + $0x50] sm:$0xff]
    %v696 = vld [vmem:[%s684 + $0x58] sm:$0xff]
    %v697 = vld [vmem:[%s684 + $0x60] sm:$0xff]
    %v698 = vld [vmem:[%s684 + $0x68] sm:$0xff]
    %v699 = vld [vmem:[%s684 + $0x70] sm:$0xff]
    %v700 = vld [vmem:[%s684 + $0x78] sm:$0xff]
    %701 = vmatprep.subr.mxu0 0.0
    %702 = vmatpush1.msra.mxu0 %v700
    %703 = vmatprep.subr.mxu0 0.0
    %704 = vmatpush1.msra.mxu0 %v699
    %705 = vmatprep.subr.mxu0 0.0
    %706 = vmatpush1.msra.mxu0 %v698
    %707 = vmatprep.subr.mxu0 0.0
    %708 = vmatpush1.msra.mxu0 %v697
    %709 = vmatprep.subr.mxu0 0.0
    %710 = vmatpush1.msra.mxu0 %v696
    %711 = vmatprep.subr.mxu0 0.0
    %712 = vmatpush1.msra.mxu0 %v695
    %713 = vmatprep.subr.mxu0 0.0
    %714 = vmatpush1.msra.mxu0 %v694
    %715 = vmatprep.subr.mxu0 0.0
    %716 = vmatpush1.msra.mxu0 %v693
    %717 = vmatprep.subr.mxu0 0.0
    %718 = vmatpush1.msra.mxu0 %v692
    %719 = vmatprep.subr.mxu0 0.0
    %720 = vmatpush1.msra.mxu0 %v691
    %721 = vmatprep.subr.mxu0 0.0
    %722 = vmatpush1.msra.mxu0 %v690
    %723 = vmatprep.subr.mxu0 0.0
    %724 = vmatpush1.msra.mxu0 %v689
    %725 = vmatprep.subr.mxu0 0.0
    %726 = vmatpush1.msra.mxu0 %v688
    %727 = vmatprep.subr.mxu0 0.0
    %728 = vmatpush1.msra.mxu0 %v687
    %729 = vmatprep.subr.mxu0 0.0
    %730 = vmatpush1.msra.mxu0 %v686
    %731 = vmatprep.subr.mxu0 0.0
    %732 = vmatpush1.msra.mxu0 %v685
    %733 = vmatprep.subr.mxu0 0.0
    %734 = vmatpush2.msra.mxu0 0.0
    %735 = vmatprep.subr.mxu0 0.0
    %736 = vmatpush2.msra.mxu0 0.0
    %737 = vmatprep.subr.mxu0 0.0
    %738 = vmatpush2.msra.mxu0 0.0
    %739 = vmatprep.subr.mxu0 0.0
    %740 = vmatpush2.msra.mxu0 0.0
    %741 = vmatprep.subr.mxu0 0.0
    %742 = vmatpush2.msra.mxu0 0.0
    %743 = vmatprep.subr.mxu0 0.0
    %744 = vmatpush2.msra.mxu0 0.0
    %745 = vmatprep.subr.mxu0 0.0
    %746 = vmatpush2.msra.mxu0 0.0
    %747 = vmatprep.subr.mxu0 0.0
    %748 = vmatpush2.msra.mxu0 0.0
    %749 = vmatprep.subr.mxu0 0.0
    %750 = vmatpush2.msra.mxu0 0.0
    %751 = vmatprep.subr.mxu0 0.0
    %752 = vmatpush2.msra.mxu0 0.0
    %753 = vmatprep.subr.mxu0 0.0
    %754 = vmatpush2.msra.mxu0 0.0
    %755 = vmatprep.subr.mxu0 0.0
    %756 = vmatpush2.msra.mxu0 0.0
    %757 = vmatprep.subr.mxu0 0.0
    %758 = vmatpush2.msra.mxu0 0.0
    %759 = vmatprep.subr.mxu0 0.0
    %760 = vmatpush2.msra.mxu0 0.0
    %761 = vmatprep.subr.mxu0 0.0
    %762 = vmatpush2.msra.mxu0 0.0
    %763 = vmatprep.subr.mxu0 0.0
    %764 = vmatpush2.msra.mxu0 0.0
    %765 = vmatprep.mubr.f32.mxu0 0.0
    %766 = vmatmul.mubr.f32.gmra.mxu0 %v683
    %v767 = vpop.f32.mrf.mxu0
    %v768 = vadd.f32 %v257, %v767
    %v769 = vpop.f32.mrf.mxu0
    %770 = vdwg.mxu0
    %772 = vrot.lane.b32.xlu0 %v512, 16
    %v773 = vpop.permute.xlu0 %772
    %776 = vrot.lane.b32.xlu0 %v640, 32
    %v777 = vpop.permute.xlu0 %776
    %780 = vrot.lane.b32.xlu0 %v768, 48
    %v781 = vpop.permute.xlu0 %780
    %vm783 = vcmask 130048
    %v784 = vsel %vm783, %v384, %v773
    %vm785 = vcmask 261120
    %v786 = vsel %vm785, %v784, %v777
    %vm787 = vcmask 392192
    %v788 = vsel %vm787, %v786, %v781
    %vm789 = vcmask 523264
    %790 = vst.msk [vmem:[#allocation2] sm:$0xff] %vm789, %v788
    // Predicated region
    $region18: #{tpu_custom_call.1} parent=1 // pred_check
      _
    $region19: #{tpu_custom_call.1} parent=1 // pred_check_branch
      %792 = sbr.rel (0) target = $region21
    $region20: #{tpu_custom_call.1} parent=1 // pred_region
      %s794 = ssub.s32 128, 128
      %795 = vsyncadd [#allocation3], %s794
      %s797 = sshll.u32 [#allocation2], 4
      %s798 = int_to_ptr.vmem [resolvable:$true] %s797
      %800 = dma.vmem_to_hbm [thread:$0]  %s798, 128, %s4, [#allocation3]
    $region21: #{tpu_custom_call.1} parent=1 // pred_fallthru
      _
    // Predicated region
    $region22: #{tpu_custom_call.1} parent=1 // pred_check
      _
    $region23: #{tpu_custom_call.1} parent=1 // pred_check_branch
      %802 = sbr.rel (0) target = $region25
    $region24: #{tpu_custom_call.1} parent=1 // pred_region
      %803 = dma.done [#allocation3], 128
    $region25: #{tpu_custom_call.1} parent=1 // pred_fallthru
      _
    %804 = vsyncpa [#allocation3], 1

</llo_original>
